<compile_context>
chip_gen: v7x
topology: tpu7x:2x2x1
jax: 0.10.0
libtpu: 0.0.40
codegen_flags: <defaults>
</compile_context>

<pallas_src>
import functools
import math

import jax
import jax.numpy as jnp
from jax import lax
from jax.experimental import pallas as pl
from jax.experimental.pallas import tpu as pltpu


# -----------------------------------------------------------------------------
# Fused kernel: QKV projections + MH attention + W_out + residual + LayerNorm
# -----------------------------------------------------------------------------
def _mhsa_ln_res_kernel(x_ref, q_ref, k_ref, v_ref, wh_ref, b_ref, wo_ref,
                        g_ref, beta_ref, o_ref, stg_ref, *,
                        n_head: int, eps: float, use_res: bool, use_ln: bool):
    f32 = jnp.float32
    cdt = jnp.bfloat16          # MXU input dtype (f32 accumulation)

    tb, n_tok, d_model = q_ref.shape
    dh = d_model // n_head
    rows = tb * n_tok

    # ---- Q / K / V projections: one (rows, D) @ (D, D) MXU matmul each ----
    # (inputs pre-cast to bf16 in the wrapper; 1/sqrt(dh) already folded into
    #  Wq / bq, so no score scaling is needed below)
    def proj(a_ref, idx):
        a2 = a_ref[...].reshape(rows, d_model)
        y = jnp.dot(a2, wh_ref[idx], preferred_element_type=f32)
        return (y + b_ref[idx:idx + 1, :].astype(f32)).reshape(tb, n_tok, d_model)

    q = proj(q_ref, 0)
    k = proj(k_ref, 1)
    v = proj(v_ref, 2)

    # ---- per-head attention, batched over the TB instance axis ----
    for h in range(n_head):
        sl = slice(h * dh, (h + 1) * dh)
        qh = q[:, :, sl].astype(cdt)
        kh = k[:, :, sl].astype(cdt)
        vh = v[:, :, sl].astype(cdt)
        s = jnp.einsum('bqd,bkd->bqk', qh, kh,
                       preferred_element_type=f32)                 # (tb, N, N)
        m = jnp.max(s, axis=-1, keepdims=True)
        p = jnp.exp(s - m)
        p = p * pl.reciprocal(jnp.sum(p, axis=-1, keepdims=True), approx=True)
        oh = jnp.einsum('bqk,bkd->bqd', p.astype(cdt), vh,
                        preferred_element_type=f32)                # (tb, N, dh)
        stg_ref[:, :, sl] = oh.astype(cdt)

    # ---- single K=D output projection over the staged head outputs ----
    o_cat = stg_ref[...].reshape(rows, d_model)                    # bf16
    y = jnp.dot(o_cat, wo_ref[...], preferred_element_type=f32)    # (rows, D)

    # ---- residual + LayerNorm epilogue (f32) ----
    if use_res:
        y = y + x_ref[...].reshape(rows, d_model).astype(f32)
    if use_ln:
        mu = jnp.mean(y, axis=-1, keepdims=True)
        var = jnp.mean(jnp.square(y - mu), axis=-1, keepdims=True)
        y = (y - mu) * lax.rsqrt(var + eps)
        y = y * g_ref[...].astype(f32) + beta_ref[...].astype(f32)

    o_ref[...] = y.reshape(tb, n_tok, d_model).astype(o_ref.dtype)


# -----------------------------------------------------------------------------
# Wrapper
# -----------------------------------------------------------------------------
def _choose_block_bt(BT, N, D):
    """Largest divisor of BT whose block fits a modest row budget; prefer grid>=2."""
    max_rows = max(N, min(1024, (4 << 20) // max(16 * D, 1)))
    tb = 1
    for cand in range(1, BT + 1):
        if BT % cand == 0 and cand * N <= max_rows:
            tb = cand
    if tb == BT and BT > 1:           # keep both v7x TensorCores busy
        for cand in range(BT // 2, 0, -1):
            if BT % cand == 0 and cand * N <= max_rows:
                return cand
    return tb


def mhsa_ln_res(x, q_in, k_in, v_in, params, *, n_head: int, eps: float = 1e-5,
                use_res: bool = True, use_ln: bool = True, block_bt=None):
    """x, q_in, k_in, v_in: (b, T, N, d_model) -> (b, T, N, d_model)."""
    b, T, N, D = x.shape
    assert D % n_head == 0
    BT = b * T
    dh = D // n_head
    scale = 1.0 / math.sqrt(dh)

    TB = block_bt if block_bt is not None else _choose_block_bt(BT, N, D)
    assert BT % TB == 0
    grid_len = BT // TB

    f32, b16 = jnp.float32, jnp.bfloat16

    # Fold 1/sqrt(dh) into Wq / bq; pre-cast weights to bf16 once, in the wrapper.
    w_head = params["w_head"].astype(f32) * jnp.array([scale, 1.0, 1.0], f32)[:, None, None]
    w_head_b16 = w_head.astype(b16)                                     # (3, D, D)
    bias = params["bias"].astype(f32) * jnp.array([scale, 1.0, 1.0], f32)[:, None]
    w_out_b16 = params["w_out"].astype(b16)                             # (D, D)
    ln_g = params["ln_g"].astype(f32).reshape(1, D)
    ln_b = params["ln_b"].astype(f32).reshape(1, D)

    # Fold (b, T) into one parallel axis; keep D as the minor (lane) dim.
    # X stays f32 (residual / LN input); Q/K/V streams are pre-cast to bf16.
    # TODO(synk): if callers pass the same tensor for X/Q/K/V, dedupe the
    #             activation inputs to quarter the HBM read traffic.
    x3 = x.reshape(BT, N, D)
    q3 = q_in.reshape(BT, N, D).astype(b16)
    k3 = k_in.reshape(BT, N, D).astype(b16)
    v3 = v_in.reshape(BT, N, D).astype(b16)

    act_spec = lambda: pl.BlockSpec((TB, N, D), lambda i: (i, 0, 0))
    const = lambda *shape: pl.BlockSpec(shape, lambda i, s=shape: (0,) * len(s))

    kernel = functools.partial(_mhsa_ln_res_kernel, n_head=n_head, eps=eps,
                               use_res=use_res, use_ln=use_ln)

    # Cost hint for the XLA scheduler + explicit VMEM budget (v5e default is 16 MiB).
    flops = 8 * BT * N * D * D + 4 * BT * n_head * N * N * dh
    transcendentals = BT * n_head * N * N
    bytes_accessed = BT * N * D * (4 + 3 * 2 + 4) + 4 * D * D * 2 + 5 * D * 4
    act_block_bytes = TB * N * D * (4 + 3 * 2 + 4 + 2)
    weight_bytes = 4 * D * D * 2 + 5 * D * 4
    vmem_limit = int(min(max(4 * act_block_bytes + 2 * weight_bytes, 32 << 20),
                         64 << 20))

    out = pl.pallas_call(
        kernel,
        out_shape=jax.ShapeDtypeStruct((BT, N, D), x.dtype),
        grid=(grid_len,),
        in_specs=[
            act_spec(),                       # X (residual, f32)
            act_spec(),                       # Q input (bf16)
            act_spec(),                       # K input (bf16)
            act_spec(),                       # V input (bf16)
            const(3, D, D),                   # W_head (bf16, scale folded into Wq)
            const(3, D),                      # bias   (f32,  scale folded into bq)
            const(D, D),                      # W_out  (bf16)
            const(1, D),                      # LN gamma
            const(1, D),                      # LN beta
        ],
        out_specs=pl.BlockSpec((TB, N, D), lambda i: (i, 0, 0)),
        scratch_shapes=[pltpu.VMEM((TB, N, D), b16)],   # per-head output staging
        compiler_params=pltpu.CompilerParams(
            dimension_semantics=("parallel",),
            vmem_limit_bytes=vmem_limit),
        cost_estimate=pl.CostEstimate(flops=flops,
                                      transcendentals=transcendentals,
                                      bytes_accessed=bytes_accessed),
    )(x3, q3, k3, v3, w_head_b16, bias, w_out_b16, ln_g, ln_b)
    return out.reshape(b, T, N, D)


# -----------------------------------------------------------------------------
# Pure-JAX reference (bf16 MXU inputs + approx reciprocal => loose tolerance)
# -----------------------------------------------------------------------------
def reference_forward(x, q_in, k_in, v_in, p, *, n_head, eps=1e-5):
    b, T, N, D = x.shape
    dh = D // n_head
    proj = lambda a, i: a @ p["w_head"][i] + p["bias"][i]
    q, k, v = proj(q_in, 0), proj(k_in, 1), proj(v_in, 2)
    split = lambda t: t.reshape(b, T, N, n_head, dh).transpose(0, 1, 3, 2, 4)
    qh, kh, vh = split(q), split(k), split(v)
    s = jnp.einsum("bthnd,bthmd->bthnm", qh, kh) / math.sqrt(dh)
    a = jax.nn.softmax(s, axis=-1)
    o = jnp.einsum("bthnm,bthmd->bthnd", a, vh)
    o = o.transpose(0, 1, 3, 2, 4).reshape(b, T, N, D)
    y = o @ p["w_out"] + x
    mu = y.mean(-1, keepdims=True)
    var = ((y - mu) ** 2).mean(-1, keepdims=True)
    return (y - mu) / jnp.sqrt(var + eps) * p["ln_g"][0] + p["ln_b"][0]


# -----------------------------------------------------------------------------
if __name__ == "__main__":
    b, T, N, D = 2, 2, 8, 32          # (batch, time, tokens, d_model)
    n_head = 4

    key = jax.random.PRNGKey(0)
    kx, kq, kk, kv, kw, kwo, kb = jax.random.split(key, 7)
    X = jax.random.normal(kx, (b, T, N, D), jnp.float32)
    Q = jax.random.normal(kq, (b, T, N, D), jnp.float32)
    K = jax.random.normal(kk, (b, T, N, D), jnp.float32)
    V = jax.random.normal(kv, (b, T, N, D), jnp.float32)

    lim = math.sqrt(6.0 / (D + D))    # xavier_uniform-style init
    params = dict(
        w_head=jax.random.uniform(kw, (3, D, D), jnp.float32, -lim, lim),
        w_out=jax.random.uniform(kwo, (D, D), jnp.float32, -lim, lim),
        bias=jax.random.uniform(kb, (3, D), jnp.float32, -lim, lim),
        ln_g=jnp.ones((1, D), jnp.float32),
        ln_b=jnp.zeros((1, D), jnp.float32),
    )

    fwd = jax.jit(functools.partial(mhsa_ln_res, n_head=n_head))
    out = jax.block_until_ready(fwd(X, Q, K, V, params))

    assert out.shape == (b, T, N, D)
    assert bool(jnp.all(jnp.isfinite(out)))

    ref = reference_forward(X, Q, K, V, params, n_head=n_head)
    max_err = float(jnp.max(jnp.abs(out - ref)))
    # bf16 MXU inputs + EUP approx reciprocal -> loose tolerance on LN'd output.
    assert max_err < 2e-1, f"mismatch vs reference: max abs err {max_err}"

    print("KERNEL_OK")
</pallas_src>

<mosaic_0001>
module attributes {stable_mosaic.version = 11 : i64} {
  func.func @_mhsa_ln_res_kernel(%arg0: i32, %arg1: memref<2x8x32xf32, #tpu.memory_space<vmem>>, %arg2: memref<2x8x32xbf16, #tpu.memory_space<vmem>>, %arg3: memref<2x8x32xbf16, #tpu.memory_space<vmem>>, %arg4: memref<2x8x32xbf16, #tpu.memory_space<vmem>>, %arg5: memref<3x32x32xbf16, #tpu.memory_space<vmem>>, %arg6: memref<3x32xf32, #tpu.memory_space<vmem>>, %arg7: memref<32x32xbf16, #tpu.memory_space<vmem>>, %arg8: memref<1x32xf32, #tpu.memory_space<vmem>>, %arg9: memref<1x32xf32, #tpu.memory_space<vmem>>, %arg10: memref<2x8x32xf32, #tpu.memory_space<vmem>>, %arg11: memref<2x8x32xbf16, #tpu.memory_space<vmem>>) attributes {dimension_semantics = [#tpu.dimension_semantics<parallel>], iteration_bounds = array<i64: 2>, scalar_prefetch = 0 : i64, scratch_operands = 1 : i64, tpu.core_type = #tpu.core_type<tc>, window_params = [{transform_indices = @transform_0, window_bounds = array<i64: 2, 8, 32>}, {transform_indices = @transform_1, window_bounds = array<i64: 2, 8, 32>}, {transform_indices = @transform_2, window_bounds = array<i64: 2, 8, 32>}, {transform_indices = @transform_3, window_bounds = array<i64: 2, 8, 32>}, {pipeline_mode = #tpu.pipeline_mode<synchronous>, transform_indices = @transform_4, window_bounds = array<i64: 3, 32, 32>}, {pipeline_mode = #tpu.pipeline_mode<synchronous>, transform_indices = @transform_5, window_bounds = array<i64: 3, 32>}, {pipeline_mode = #tpu.pipeline_mode<synchronous>, transform_indices = @transform_6, window_bounds = array<i64: 32, 32>}, {pipeline_mode = #tpu.pipeline_mode<synchronous>, transform_indices = @transform_7, window_bounds = array<i64: 1, 32>}, {pipeline_mode = #tpu.pipeline_mode<synchronous>, transform_indices = @transform_8, window_bounds = array<i64: 1, 32>}, {transform_indices = @transform_9, window_bounds = array<i64: 2, 8, 32>}]} {
    %c0 = arith.constant 0 : index
    %c0_0 = arith.constant 0 : index
    %c0_1 = arith.constant 0 : index
    %0 = vector.load %arg2[%c0, %c0_0, %c0_1] : memref<2x8x32xbf16, #tpu.memory_space<vmem>>, vector<2x8x32xbf16>
    %1 = vector.shape_cast %0 : vector<2x8x32xbf16> to vector<16x32xbf16>
    %c0_2 = arith.constant 0 : index
    %c0_3 = arith.constant 0 : index
    %c0_4 = arith.constant 0 : index
    %2 = vector.load %arg5[%c0_2, %c0_3, %c0_4] : memref<3x32x32xbf16, #tpu.memory_space<vmem>>, vector<1x32x32xbf16>
    %3 = vector.shape_cast %2 : vector<1x32x32xbf16> to vector<32x32xbf16>
    %cst = arith.constant dense<0.000000e+00> : vector<16x32xf32>
    %4 = tpu.matmul %1, %3, %cst {dimension_numbers = #tpu.dot_dimension_numbers<[1], [0], [0], [1], [0, 0, 1, 1], [], []>} : vector<16x32xbf16>, vector<32x32xbf16>, vector<16x32xf32> -> vector<16x32xf32>
    %c0_5 = arith.constant 0 : index
    %c0_6 = arith.constant 0 : index
    %5 = vector.load %arg6[%c0_5, %c0_6] : memref<3x32xf32, #tpu.memory_space<vmem>>, vector<1x32xf32>
    %6 = vector.broadcast %5 : vector<1x32xf32> to vector<16x32xf32>
    %7 = arith.addf %4, %6 : vector<16x32xf32>
    %8 = vector.shape_cast %7 : vector<16x32xf32> to vector<2x8x32xf32>
    %c0_7 = arith.constant 0 : index
    %c0_8 = arith.constant 0 : index
    %c0_9 = arith.constant 0 : index
    %9 = vector.load %arg3[%c0_7, %c0_8, %c0_9] : memref<2x8x32xbf16, #tpu.memory_space<vmem>>, vector<2x8x32xbf16>
    %10 = vector.shape_cast %9 : vector<2x8x32xbf16> to vector<16x32xbf16>
    %c1 = arith.constant 1 : index
    %c0_10 = arith.constant 0 : index
    %c0_11 = arith.constant 0 : index
    %11 = vector.load %arg5[%c1, %c0_10, %c0_11] : memref<3x32x32xbf16, #tpu.memory_space<vmem>>, vector<1x32x32xbf16>
    %12 = vector.shape_cast %11 : vector<1x32x32xbf16> to vector<32x32xbf16>
    %cst_12 = arith.constant dense<0.000000e+00> : vector<16x32xf32>
    %13 = tpu.matmul %10, %12, %cst_12 {dimension_numbers = #tpu.dot_dimension_numbers<[1], [0], [0], [1], [0, 0, 1, 1], [], []>} : vector<16x32xbf16>, vector<32x32xbf16>, vector<16x32xf32> -> vector<16x32xf32>
    %c1_13 = arith.constant 1 : index
    %c0_14 = arith.constant 0 : index
    %14 = vector.load %arg6[%c1_13, %c0_14] : memref<3x32xf32, #tpu.memory_space<vmem>>, vector<1x32xf32>
    %15 = vector.broadcast %14 : vector<1x32xf32> to vector<16x32xf32>
    %16 = arith.addf %13, %15 : vector<16x32xf32>
    %17 = vector.shape_cast %16 : vector<16x32xf32> to vector<2x8x32xf32>
    %c0_15 = arith.constant 0 : index
    %c0_16 = arith.constant 0 : index
    %c0_17 = arith.constant 0 : index
    %18 = vector.load %arg4[%c0_15, %c0_16, %c0_17] : memref<2x8x32xbf16, #tpu.memory_space<vmem>>, vector<2x8x32xbf16>
    %19 = vector.shape_cast %18 : vector<2x8x32xbf16> to vector<16x32xbf16>
    %c2 = arith.constant 2 : index
    %c0_18 = arith.constant 0 : index
    %c0_19 = arith.constant 0 : index
    %20 = vector.load %arg5[%c2, %c0_18, %c0_19] : memref<3x32x32xbf16, #tpu.memory_space<vmem>>, vector<1x32x32xbf16>
    %21 = vector.shape_cast %20 : vector<1x32x32xbf16> to vector<32x32xbf16>
    %cst_20 = arith.constant dense<0.000000e+00> : vector<16x32xf32>
    %22 = tpu.matmul %19, %21, %cst_20 {dimension_numbers = #tpu.dot_dimension_numbers<[1], [0], [0], [1], [0, 0, 1, 1], [], []>} : vector<16x32xbf16>, vector<32x32xbf16>, vector<16x32xf32> -> vector<16x32xf32>
    %c2_21 = arith.constant 2 : index
    %c0_22 = arith.constant 0 : index
    %23 = vector.load %arg6[%c2_21, %c0_22] : memref<3x32xf32, #tpu.memory_space<vmem>>, vector<1x32xf32>
    %24 = vector.broadcast %23 : vector<1x32xf32> to vector<16x32xf32>
    %25 = arith.addf %22, %24 : vector<16x32xf32>
    %26 = vector.shape_cast %25 : vector<16x32xf32> to vector<2x8x32xf32>
    %27 = vector.extract_strided_slice %8 {offsets = [0, 0, 0], sizes = [2, 8, 8], strides = [1, 1, 1]} : vector<2x8x32xf32> to vector<2x8x8xf32>
    %28 = arith.truncf %27 : vector<2x8x8xf32> to vector<2x8x8xbf16>
    %29 = vector.extract_strided_slice %17 {offsets = [0, 0, 0], sizes = [2, 8, 8], strides = [1, 1, 1]} : vector<2x8x32xf32> to vector<2x8x8xf32>
    %30 = arith.truncf %29 : vector<2x8x8xf32> to vector<2x8x8xbf16>
    %31 = vector.extract_strided_slice %26 {offsets = [0, 0, 0], sizes = [2, 8, 8], strides = [1, 1, 1]} : vector<2x8x32xf32> to vector<2x8x8xf32>
    %32 = arith.truncf %31 : vector<2x8x8xf32> to vector<2x8x8xbf16>
    "tpu.trace_start"() <{level = 10 : i32, message = "bqd,bkd->bqk"}> : () -> ()
    %cst_23 = arith.constant dense<0.000000e+00> : vector<2x8x8xf32>
    %33 = tpu.matmul %28, %30, %cst_23 {dimension_numbers = #tpu.dot_dimension_numbers<[2], [2], [1], [1], [0, 0, 0, 1, 1, 1], [0], [0]>} : vector<2x8x8xbf16>, vector<2x8x8xbf16>, vector<2x8x8xf32> -> vector<2x8x8xf32>
    "tpu.trace_stop"() : () -> ()
    %cst_24 = arith.constant dense<0xFF800000> : vector<2x8xf32>
    %34 = vector.multi_reduction <maximumf>, %33, %cst_24 [2] : vector<2x8x8xf32> to vector<2x8xf32>
    %35 = vector.shape_cast %34 : vector<2x8xf32> to vector<2x8x1xf32>
    %36 = vector.broadcast %35 : vector<2x8x1xf32> to vector<2x8x8xf32>
    %37 = arith.subf %33, %36 : vector<2x8x8xf32>
    %38 = math.exp %37 : vector<2x8x8xf32>
    %cst_25 = arith.constant dense<0.000000e+00> : vector<2x8xf32>
    %39 = vector.multi_reduction <add>, %38, %cst_25 [2] : vector<2x8x8xf32> to vector<2x8xf32>
    %40 = vector.shape_cast %39 : vector<2x8xf32> to vector<2x8x1xf32>
    %41 = tpu.reciprocal %40 {approx = true} : vector<2x8x1xf32> -> vector<2x8x1xf32>
    %42 = vector.broadcast %41 : vector<2x8x1xf32> to vector<2x8x8xf32>
    %43 = arith.mulf %38, %42 : vector<2x8x8xf32>
    %44 = arith.truncf %43 : vector<2x8x8xf32> to vector<2x8x8xbf16>
    "tpu.trace_start"() <{level = 10 : i32, message = "bqk,bkd->bqd"}> : () -> ()
    %cst_26 = arith.constant dense<0.000000e+00> : vector<2x8x8xf32>
    %45 = tpu.matmul %44, %32, %cst_26 {dimension_numbers = #tpu.dot_dimension_numbers<[2], [1], [1], [2], [0, 0, 0, 1, 1, 2], [0], [0]>} : vector<2x8x8xbf16>, vector<2x8x8xbf16>, vector<2x8x8xf32> -> vector<2x8x8xf32>
    "tpu.trace_stop"() : () -> ()
    %46 = arith.truncf %45 : vector<2x8x8xf32> to vector<2x8x8xbf16>
    %c0_27 = arith.constant 0 : index
    %c0_28 = arith.constant 0 : index
    %c0_29 = arith.constant 0 : index
    %47 = vector.load %arg11[%c0_27, %c0_28, %c0_29] : memref<2x8x32xbf16, #tpu.memory_space<vmem>>, vector<2x8x8xbf16>
    tpu.vector_store %arg11[%c0_27, %c0_28, %c0_29], %46 {strides = array<i32>} : memref<2x8x32xbf16, #tpu.memory_space<vmem>>, vector<2x8x8xbf16>,
    %48 = vector.extract_strided_slice %8 {offsets = [0, 0, 8], sizes = [2, 8, 8], strides = [1, 1, 1]} : vector<2x8x32xf32> to vector<2x8x8xf32>
    %49 = arith.truncf %48 : vector<2x8x8xf32> to vector<2x8x8xbf16>
    %50 = vector.extract_strided_slice %17 {offsets = [0, 0, 8], sizes = [2, 8, 8], strides = [1, 1, 1]} : vector<2x8x32xf32> to vector<2x8x8xf32>
    %51 = arith.truncf %50 : vector<2x8x8xf32> to vector<2x8x8xbf16>
    %52 = vector.extract_strided_slice %26 {offsets = [0, 0, 8], sizes = [2, 8, 8], strides = [1, 1, 1]} : vector<2x8x32xf32> to vector<2x8x8xf32>
    %53 = arith.truncf %52 : vector<2x8x8xf32> to vector<2x8x8xbf16>
    "tpu.trace_start"() <{level = 10 : i32, message = "bqd,bkd->bqk"}> : () -> ()
    %cst_30 = arith.constant dense<0.000000e+00> : vector<2x8x8xf32>
    %54 = tpu.matmul %49, %51, %cst_30 {dimension_numbers = #tpu.dot_dimension_numbers<[2], [2], [1], [1], [0, 0, 0, 1, 1, 1], [0], [0]>} : vector<2x8x8xbf16>, vector<2x8x8xbf16>, vector<2x8x8xf32> -> vector<2x8x8xf32>
    "tpu.trace_stop"() : () -> ()
    %cst_31 = arith.constant dense<0xFF800000> : vector<2x8xf32>
    %55 = vector.multi_reduction <maximumf>, %54, %cst_31 [2] : vector<2x8x8xf32> to vector<2x8xf32>
    %56 = vector.shape_cast %55 : vector<2x8xf32> to vector<2x8x1xf32>
    %57 = vector.broadcast %56 : vector<2x8x1xf32> to vector<2x8x8xf32>
    %58 = arith.subf %54, %57 : vector<2x8x8xf32>
    %59 = math.exp %58 : vector<2x8x8xf32>
    %cst_32 = arith.constant dense<0.000000e+00> : vector<2x8xf32>
    %60 = vector.multi_reduction <add>, %59, %cst_32 [2] : vector<2x8x8xf32> to vector<2x8xf32>
    %61 = vector.shape_cast %60 : vector<2x8xf32> to vector<2x8x1xf32>
    %62 = tpu.reciprocal %61 {approx = true} : vector<2x8x1xf32> -> vector<2x8x1xf32>
    %63 = vector.broadcast %62 : vector<2x8x1xf32> to vector<2x8x8xf32>
    %64 = arith.mulf %59, %63 : vector<2x8x8xf32>
    %65 = arith.truncf %64 : vector<2x8x8xf32> to vector<2x8x8xbf16>
    "tpu.trace_start"() <{level = 10 : i32, message = "bqk,bkd->bqd"}> : () -> ()
    %cst_33 = arith.constant dense<0.000000e+00> : vector<2x8x8xf32>
    %66 = tpu.matmul %65, %53, %cst_33 {dimension_numbers = #tpu.dot_dimension_numbers<[2], [1], [1], [2], [0, 0, 0, 1, 1, 2], [0], [0]>} : vector<2x8x8xbf16>, vector<2x8x8xbf16>, vector<2x8x8xf32> -> vector<2x8x8xf32>
    "tpu.trace_stop"() : () -> ()
    %67 = arith.truncf %66 : vector<2x8x8xf32> to vector<2x8x8xbf16>
    %c0_34 = arith.constant 0 : index
    %c0_35 = arith.constant 0 : index
    %c8 = arith.constant 8 : index
    %68 = vector.load %arg11[%c0_34, %c0_35, %c8] : memref<2x8x32xbf16, #tpu.memory_space<vmem>>, vector<2x8x8xbf16>
    tpu.vector_store %arg11[%c0_34, %c0_35, %c8], %67 {strides = array<i32>} : memref<2x8x32xbf16, #tpu.memory_space<vmem>>, vector<2x8x8xbf16>,
    %69 = vector.extract_strided_slice %8 {offsets = [0, 0, 16], sizes = [2, 8, 8], strides = [1, 1, 1]} : vector<2x8x32xf32> to vector<2x8x8xf32>
    %70 = arith.truncf %69 : vector<2x8x8xf32> to vector<2x8x8xbf16>
    %71 = vector.extract_strided_slice %17 {offsets = [0, 0, 16], sizes = [2, 8, 8], strides = [1, 1, 1]} : vector<2x8x32xf32> to vector<2x8x8xf32>
    %72 = arith.truncf %71 : vector<2x8x8xf32> to vector<2x8x8xbf16>
    %73 = vector.extract_strided_slice %26 {offsets = [0, 0, 16], sizes = [2, 8, 8], strides = [1, 1, 1]} : vector<2x8x32xf32> to vector<2x8x8xf32>
    %74 = arith.truncf %73 : vector<2x8x8xf32> to vector<2x8x8xbf16>
    "tpu.trace_start"() <{level = 10 : i32, message = "bqd,bkd->bqk"}> : () -> ()
    %cst_36 = arith.constant dense<0.000000e+00> : vector<2x8x8xf32>
    %75 = tpu.matmul %70, %72, %cst_36 {dimension_numbers = #tpu.dot_dimension_numbers<[2], [2], [1], [1], [0, 0, 0, 1, 1, 1], [0], [0]>} : vector<2x8x8xbf16>, vector<2x8x8xbf16>, vector<2x8x8xf32> -> vector<2x8x8xf32>
    "tpu.trace_stop"() : () -> ()
    %cst_37 = arith.constant dense<0xFF800000> : vector<2x8xf32>
    %76 = vector.multi_reduction <maximumf>, %75, %cst_37 [2] : vector<2x8x8xf32> to vector<2x8xf32>
    %77 = vector.shape_cast %76 : vector<2x8xf32> to vector<2x8x1xf32>
    %78 = vector.broadcast %77 : vector<2x8x1xf32> to vector<2x8x8xf32>
    %79 = arith.subf %75, %78 : vector<2x8x8xf32>
    %80 = math.exp %79 : vector<2x8x8xf32>
    %cst_38 = arith.constant dense<0.000000e+00> : vector<2x8xf32>
    %81 = vector.multi_reduction <add>, %80, %cst_38 [2] : vector<2x8x8xf32> to vector<2x8xf32>
    %82 = vector.shape_cast %81 : vector<2x8xf32> to vector<2x8x1xf32>
    %83 = tpu.reciprocal %82 {approx = true} : vector<2x8x1xf32> -> vector<2x8x1xf32>
    %84 = vector.broadcast %83 : vector<2x8x1xf32> to vector<2x8x8xf32>
    %85 = arith.mulf %80, %84 : vector<2x8x8xf32>
    %86 = arith.truncf %85 : vector<2x8x8xf32> to vector<2x8x8xbf16>
    "tpu.trace_start"() <{level = 10 : i32, message = "bqk,bkd->bqd"}> : () -> ()
    %cst_39 = arith.constant dense<0.000000e+00> : vector<2x8x8xf32>
    %87 = tpu.matmul %86, %74, %cst_39 {dimension_numbers = #tpu.dot_dimension_numbers<[2], [1], [1], [2], [0, 0, 0, 1, 1, 2], [0], [0]>} : vector<2x8x8xbf16>, vector<2x8x8xbf16>, vector<2x8x8xf32> -> vector<2x8x8xf32>
    "tpu.trace_stop"() : () -> ()
    %88 = arith.truncf %87 : vector<2x8x8xf32> to vector<2x8x8xbf16>
    %c0_40 = arith.constant 0 : index
    %c0_41 = arith.constant 0 : index
    %c16 = arith.constant 16 : index
    %89 = vector.load %arg11[%c0_40, %c0_41, %c16] : memref<2x8x32xbf16, #tpu.memory_space<vmem>>, vector<2x8x8xbf16>
    tpu.vector_store %arg11[%c0_40, %c0_41, %c16], %88 {strides = array<i32>} : memref<2x8x32xbf16, #tpu.memory_space<vmem>>, vector<2x8x8xbf16>,
    %90 = vector.extract_strided_slice %8 {offsets = [0, 0, 24], sizes = [2, 8, 8], strides = [1, 1, 1]} : vector<2x8x32xf32> to vector<2x8x8xf32>
    %91 = arith.truncf %90 : vector<2x8x8xf32> to vector<2x8x8xbf16>
    %92 = vector.extract_strided_slice %17 {offsets = [0, 0, 24], sizes = [2, 8, 8], strides = [1, 1, 1]} : vector<2x8x32xf32> to vector<2x8x8xf32>
    %93 = arith.truncf %92 : vector<2x8x8xf32> to vector<2x8x8xbf16>
    %94 = vector.extract_strided_slice %26 {offsets = [0, 0, 24], sizes = [2, 8, 8], strides = [1, 1, 1]} : vector<2x8x32xf32> to vector<2x8x8xf32>
    %95 = arith.truncf %94 : vector<2x8x8xf32> to vector<2x8x8xbf16>
    "tpu.trace_start"() <{level = 10 : i32, message = "bqd,bkd->bqk"}> : () -> ()
    %cst_42 = arith.constant dense<0.000000e+00> : vector<2x8x8xf32>
    %96 = tpu.matmul %91, %93, %cst_42 {dimension_numbers = #tpu.dot_dimension_numbers<[2], [2], [1], [1], [0, 0, 0, 1, 1, 1], [0], [0]>} : vector<2x8x8xbf16>, vector<2x8x8xbf16>, vector<2x8x8xf32> -> vector<2x8x8xf32>
    "tpu.trace_stop"() : () -> ()
    %cst_43 = arith.constant dense<0xFF800000> : vector<2x8xf32>
    %97 = vector.multi_reduction <maximumf>, %96, %cst_43 [2] : vector<2x8x8xf32> to vector<2x8xf32>
    %98 = vector.shape_cast %97 : vector<2x8xf32> to vector<2x8x1xf32>
    %99 = vector.broadcast %98 : vector<2x8x1xf32> to vector<2x8x8xf32>
    %100 = arith.subf %96, %99 : vector<2x8x8xf32>
    %101 = math.exp %100 : vector<2x8x8xf32>
    %cst_44 = arith.constant dense<0.000000e+00> : vector<2x8xf32>
    %102 = vector.multi_reduction <add>, %101, %cst_44 [2] : vector<2x8x8xf32> to vector<2x8xf32>
    %103 = vector.shape_cast %102 : vector<2x8xf32> to vector<2x8x1xf32>
    %104 = tpu.reciprocal %103 {approx = true} : vector<2x8x1xf32> -> vector<2x8x1xf32>
    %105 = vector.broadcast %104 : vector<2x8x1xf32> to vector<2x8x8xf32>
    %106 = arith.mulf %101, %105 : vector<2x8x8xf32>
    %107 = arith.truncf %106 : vector<2x8x8xf32> to vector<2x8x8xbf16>
    "tpu.trace_start"() <{level = 10 : i32, message = "bqk,bkd->bqd"}> : () -> ()
    %cst_45 = arith.constant dense<0.000000e+00> : vector<2x8x8xf32>
    %108 = tpu.matmul %107, %95, %cst_45 {dimension_numbers = #tpu.dot_dimension_numbers<[2], [1], [1], [2], [0, 0, 0, 1, 1, 2], [0], [0]>} : vector<2x8x8xbf16>, vector<2x8x8xbf16>, vector<2x8x8xf32> -> vector<2x8x8xf32>
    "tpu.trace_stop"() : () -> ()
    %109 = arith.truncf %108 : vector<2x8x8xf32> to vector<2x8x8xbf16>
    %c0_46 = arith.constant 0 : index
    %c0_47 = arith.constant 0 : index
    %c24 = arith.constant 24 : index
    %110 = vector.load %arg11[%c0_46, %c0_47, %c24] : memref<2x8x32xbf16, #tpu.memory_space<vmem>>, vector<2x8x8xbf16>
    tpu.vector_store %arg11[%c0_46, %c0_47, %c24], %109 {strides = array<i32>} : memref<2x8x32xbf16, #tpu.memory_space<vmem>>, vector<2x8x8xbf16>,
    %c0_48 = arith.constant 0 : index
    %c0_49 = arith.constant 0 : index
    %c0_50 = arith.constant 0 : index
    %111 = vector.load %arg11[%c0_48, %c0_49, %c0_50] : memref<2x8x32xbf16, #tpu.memory_space<vmem>>, vector<2x8x32xbf16>
    %112 = vector.shape_cast %111 : vector<2x8x32xbf16> to vector<16x32xbf16>
    %c0_51 = arith.constant 0 : index
    %c0_52 = arith.constant 0 : index
    %113 = vector.load %arg7[%c0_51, %c0_52] : memref<32x32xbf16, #tpu.memory_space<vmem>>, vector<32x32xbf16>
    %cst_53 = arith.constant dense<0.000000e+00> : vector<16x32xf32>
    %114 = tpu.matmul %112, %113, %cst_53 {dimension_numbers = #tpu.dot_dimension_numbers<[1], [0], [0], [1], [0, 0, 1, 1], [], []>} : vector<16x32xbf16>, vector<32x32xbf16>, vector<16x32xf32> -> vector<16x32xf32>
    %c0_54 = arith.constant 0 : index
    %c0_55 = arith.constant 0 : index
    %c0_56 = arith.constant 0 : index
    %115 = vector.load %arg1[%c0_54, %c0_55, %c0_56] : memref<2x8x32xf32, #tpu.memory_space<vmem>>, vector<2x8x32xf32>
    %116 = vector.shape_cast %115 : vector<2x8x32xf32> to vector<16x32xf32>
    %117 = arith.addf %114, %116 : vector<16x32xf32>
    %cst_57 = arith.constant dense<0.000000e+00> : vector<16xf32>
    %118 = vector.multi_reduction <add>, %117, %cst_57 [1] : vector<16x32xf32> to vector<16xf32>
    %119 = vector.shape_cast %118 : vector<16xf32> to vector<16x1xf32>
    %cst_58 = arith.constant 3.200000e+01 : f32
    %120 = vector.broadcast %cst_58 : f32 to vector<16x1xf32>
    %121 = arith.divf %119, %120 : vector<16x1xf32>
    %122 = vector.broadcast %121 : vector<16x1xf32> to vector<16x32xf32>
    %123 = arith.subf %117, %122 : vector<16x32xf32>
    %124 = arith.mulf %123, %123 : vector<16x32xf32>
    %cst_59 = arith.constant dense<0.000000e+00> : vector<16xf32>
    %125 = vector.multi_reduction <add>, %124, %cst_59 [1] : vector<16x32xf32> to vector<16xf32>
    %126 = vector.shape_cast %125 : vector<16xf32> to vector<16x1xf32>
    %cst_60 = arith.constant 3.200000e+01 : f32
    %127 = vector.broadcast %cst_60 : f32 to vector<16x1xf32>
    %128 = arith.divf %126, %127 : vector<16x1xf32>
    %129 = vector.broadcast %121 : vector<16x1xf32> to vector<16x32xf32>
    %130 = arith.subf %117, %129 : vector<16x32xf32>
    %cst_61 = arith.constant 9.99999974E-6 : f32
    %131 = vector.broadcast %cst_61 : f32 to vector<16x1xf32>
    %132 = arith.addf %128, %131 : vector<16x1xf32>
    %133 = math.rsqrt %132 : vector<16x1xf32>
    %134 = vector.broadcast %133 : vector<16x1xf32> to vector<16x32xf32>
    %135 = arith.mulf %130, %134 : vector<16x32xf32>
    %c0_62 = arith.constant 0 : index
    %c0_63 = arith.constant 0 : index
    %136 = vector.load %arg8[%c0_62, %c0_63] : memref<1x32xf32, #tpu.memory_space<vmem>>, vector<1x32xf32>
    %137 = vector.broadcast %136 : vector<1x32xf32> to vector<16x32xf32>
    %138 = arith.mulf %135, %137 : vector<16x32xf32>
    %c0_64 = arith.constant 0 : index
    %c0_65 = arith.constant 0 : index
    %139 = vector.load %arg9[%c0_64, %c0_65] : memref<1x32xf32, #tpu.memory_space<vmem>>, vector<1x32xf32>
    %140 = vector.broadcast %139 : vector<1x32xf32> to vector<16x32xf32>
    %141 = arith.addf %138, %140 : vector<16x32xf32>
    %142 = vector.shape_cast %141 : vector<16x32xf32> to vector<2x8x32xf32>
    %c0_66 = arith.constant 0 : index
    %c0_67 = arith.constant 0 : index
    %c0_68 = arith.constant 0 : index
    %143 = vector.load %arg10[%c0_66, %c0_67, %c0_68] : memref<2x8x32xf32, #tpu.memory_space<vmem>>, vector<2x8x32xf32>
    tpu.vector_store %arg10[%c0_66, %c0_67, %c0_68], %142 {strides = array<i32>} : memref<2x8x32xf32, #tpu.memory_space<vmem>>, vector<2x8x32xf32>,
    return
  }
  func.func @transform_0(%arg0: i32) -> (i32, i32, i32) {
    %c0_i32 = arith.constant 0 : i32
    %c0_i32_0 = arith.constant 0 : i32
    %c0_i32_1 = arith.constant 0 : i32
    return %arg0, %c0_i32, %c0_i32_0 : i32, i32, i32
  }
  func.func @transform_1(%arg0: i32) -> (i32, i32, i32) {
    %c0_i32 = arith.constant 0 : i32
    %c0_i32_0 = arith.constant 0 : i32
    %c0_i32_1 = arith.constant 0 : i32
    return %arg0, %c0_i32, %c0_i32_0 : i32, i32, i32
  }
  func.func @transform_2(%arg0: i32) -> (i32, i32, i32) {
    %c0_i32 = arith.constant 0 : i32
    %c0_i32_0 = arith.constant 0 : i32
    %c0_i32_1 = arith.constant 0 : i32
    return %arg0, %c0_i32, %c0_i32_0 : i32, i32, i32
  }
  func.func @transform_3(%arg0: i32) -> (i32, i32, i32) {
    %c0_i32 = arith.constant 0 : i32
    %c0_i32_0 = arith.constant 0 : i32
    %c0_i32_1 = arith.constant 0 : i32
    return %arg0, %c0_i32, %c0_i32_0 : i32, i32, i32
  }
  func.func @transform_4(%arg0: i32) -> (i32, i32, i32) {
    %c0_i32 = arith.constant 0 : i32
    %c0_i32_0 = arith.constant 0 : i32
    %c0_i32_1 = arith.constant 0 : i32
    %c0_i32_2 = arith.constant 0 : i32
    return %c0_i32, %c0_i32_0, %c0_i32_1 : i32, i32, i32
  }
  func.func @transform_5(%arg0: i32) -> (i32, i32) {
    %c0_i32 = arith.constant 0 : i32
    %c0_i32_0 = arith.constant 0 : i32
    %c0_i32_1 = arith.constant 0 : i32
    return %c0_i32, %c0_i32_0 : i32, i32
  }
  func.func @transform_6(%arg0: i32) -> (i32, i32) {
    %c0_i32 = arith.constant 0 : i32
    %c0_i32_0 = arith.constant 0 : i32
    %c0_i32_1 = arith.constant 0 : i32
    return %c0_i32, %c0_i32_0 : i32, i32
  }
  func.func @transform_7(%arg0: i32) -> (i32, i32) {
    %c0_i32 = arith.constant 0 : i32
    %c0_i32_0 = arith.constant 0 : i32
    %c0_i32_1 = arith.constant 0 : i32
    return %c0_i32, %c0_i32_0 : i32, i32
  }
  func.func @transform_8(%arg0: i32) -> (i32, i32) {
    %c0_i32 = arith.constant 0 : i32
    %c0_i32_0 = arith.constant 0 : i32
    %c0_i32_1 = arith.constant 0 : i32
    return %c0_i32, %c0_i32_0 : i32, i32
  }
  func.func @transform_9(%arg0: i32) -> (i32, i32, i32) {
    %c0_i32 = arith.constant 0 : i32
    %c0_i32_0 = arith.constant 0 : i32
    %c0_i32_1 = arith.constant 0 : i32
    return %arg0, %c0_i32, %c0_i32_0 : i32, i32, i32
  }
}

</mosaic_0001>

<llo_original>
// kernel: mhsa_ln_res.1
$region0: #{mhsa_ln_res.1}
  #allocation0 [shape = 'u32[]', space=smem, size = 0x4, offset = 0x4, fixed_abs, tag = 'smem constant byte address 0x4 - core index']
  #allocation1 [shape = 'u32[144,128]{1,0:T(1,128)}', space=vmem, size = 0x12000, scoped, tag = 'internal scratch']
  #allocation2 [shape = 'bf16[2,8,32]{2,1,0:T(8,128)(2,1)}', space=vmem, size = 0x1000, scoped, tag = 'scratch operand']
  %s0 = inlined_call_operand.vmem [shape: f32[4,8,32], index: 0, kind: input, shape index: {}]
  %s1 = inlined_call_operand.vmem [shape: bf16[4,8,32], index: 1, kind: input, shape index: {}]
  %s2 = inlined_call_operand.vmem [shape: bf16[4,8,32], index: 2, kind: input, shape index: {}]
  %s3 = inlined_call_operand.vmem [shape: bf16[4,8,32], index: 3, kind: input, shape index: {}]
  %s4 = inlined_call_operand.vmem [shape: bf16[3,32,32], index: 4, kind: input, shape index: {}]
  %s5 = inlined_call_operand.vmem [shape: f32[3,32], index: 5, kind: input, shape index: {}]
  %s6 = inlined_call_operand.vmem [shape: bf16[32,32], index: 6, kind: input, shape index: {}]
  %s7 = inlined_call_operand.vmem [shape: f32[1,32], index: 7, kind: input, shape index: {}]
  %s8 = inlined_call_operand.vmem [shape: f32[1,32], index: 8, kind: input, shape index: {}]
  %s9 = inlined_call_operand.hbm [shape: f32[4,8,32], index: 9, kind: output, shape index: {}]
  %s10 = sld [smem:[#allocation0]]
  $region69: #{mhsa_ln_res.1} parent=0
    _
  %s12 = ssub.s32 1, %s10
  %s13 = scalar_select 0, %s12, %s10
  $region1: #{mhsa_ln_res.1} parent=0
    #allocation3 [shape = 'u8[16384]{0}', space=vmem, size = 0x4000, scoped, tag = 'output window, operand 0']
    #allocation4 [shape = 's32[2]{0}', space=sflag, size = 0x8, scoped, tag = 'scoped memory for mhsa_ln_res.1']
    %14 = vsyncpa [#allocation4], 0
    %s15 = scalar_lea.sflag [#allocation4], 1
    %16 = vsyncpa %s15, 0
    loop: start=0, step=1, limit=4
    $region2: #{mhsa_ln_res.1} parent=1 // loop_pre_header
      _
    $region3: #{mhsa_ln_res.1} parent=1 // loop_header
      %s18 = sphi 0, %s22
      %p19 = scmp.ge.s32.totalorder %s18, 4
      %s28 = sphi 0, %s30
      %s31 = sphi 0, %s28
      %s32 = sphi 0, %s31
      %s48 = sphi 0, %s32
      %s54 = sphi 0, %s56
      %s57 = sphi 0, %s54
      %s58 = sphi 0, %s57
      %s74 = sphi 0, %s58
      %s80 = sphi 0, %s82
      %s83 = sphi 0, %s80
      %s84 = sphi 0, %s83
      %s100 = sphi 0, %s84
      %s106 = sphi 0, %s108
      %s109 = sphi 0, %s106
      %s110 = sphi 0, %s109
      %s126 = sphi 0, %s110
      %s130 = sphi 0, %s130
      %s132 = sphi 0, %s130
      %s133 = sphi 0, %s132
      %s147 = sphi 0, %s133
      %s151 = sphi 0, %s151
      %s153 = sphi 0, %s151
      %s154 = sphi 0, %s153
      %s168 = sphi 0, %s154
      %s172 = sphi 0, %s172
      %s174 = sphi 0, %s172
      %s175 = sphi 0, %s174
      %s189 = sphi 0, %s175
      %s193 = sphi 0, %s193
      %s195 = sphi 0, %s193
      %s196 = sphi 0, %s195
      %s210 = sphi 0, %s196
      %s214 = sphi 0, %s214
      %s216 = sphi 0, %s214
      %s217 = sphi 0, %s216
      %s231 = sphi 0, %s217
      %s237 = sphi 0, %s239
      %s240 = sphi 0, %s237
      %s241 = sphi 0, %s240
      %s257 = sphi 0, %s241
    $region4: #{mhsa_ln_res.1} parent=1 // loop_header_branch
      %21 = sbr.rel (%p19) target = $region8
    $region5: #{mhsa_ln_res.1} parent=1 // loop_body
      %s23 = ssub.s32 %s18, 1
      %s24 = ssub.s32 %s18, 2
      %s25 = sadd.s32 %s18, 1
      %s26 = ssub.s32 %s18, %s25
      %p27 = scmp.eq.s32.totalorder %s26, 0
      %s29 = sadd.s32 %s28, 1
      %s30 = scalar_select %p27, %s28, %s29
      %p33 = pneg %p27
      %p34 = scmp.eq.s32.totalorder %s18, 1
      %p35 = por %p33, %p34
      %p36 = scmp.ne.s32.totalorder %s28, %s31
      %p37 = scmp.eq.s32.totalorder %s18, 0
      %p38 = por %p36, %p37
      %p39 = scmp.ne.s32.totalorder %s28, %s31
      %p40 = scmp.eq.s32.totalorder %s23, 1
      %p41 = por %p39, %p40
      %p42 = scmp.ne.s32.totalorder %s31, %s32
      %p43 = scmp.eq.s32.totalorder %s23, 0
      %p44 = por %p42, %p43
      %p45 = scmp.ne.s32.totalorder %s31, %s32
      %p46 = scmp.eq.s32.totalorder %s24, 1
      %p47 = por %p45, %p46
      %p49 = scmp.ne.s32.totalorder %s32, %s48
      %p50 = scmp.eq.s32.totalorder %s24, 0
      %p51 = por %p49, %p50
      %s52 = ssub.s32 %s18, %s25
      %p53 = scmp.eq.s32.totalorder %s52, 0
      %s55 = sadd.s32 %s54, 1
      %s56 = scalar_select %p53, %s54, %s55
      %p59 = pneg %p53
      %p60 = scmp.eq.s32.totalorder %s18, 1
      %p61 = por %p59, %p60
      %p62 = scmp.ne.s32.totalorder %s54, %s57
      %p63 = scmp.eq.s32.totalorder %s18, 0
      %p64 = por %p62, %p63
      %p65 = scmp.ne.s32.totalorder %s54, %s57
      %p66 = scmp.eq.s32.totalorder %s23, 1
      %p67 = por %p65, %p66
      %p68 = scmp.ne.s32.totalorder %s57, %s58
      %p69 = scmp.eq.s32.totalorder %s23, 0
      %p70 = por %p68, %p69
      %p71 = scmp.ne.s32.totalorder %s57, %s58
      %p72 = scmp.eq.s32.totalorder %s24, 1
      %p73 = por %p71, %p72
      %p75 = scmp.ne.s32.totalorder %s58, %s74
      %p76 = scmp.eq.s32.totalorder %s24, 0
      %p77 = por %p75, %p76
      %s78 = ssub.s32 %s18, %s25
      %p79 = scmp.eq.s32.totalorder %s78, 0
      %s81 = sadd.s32 %s80, 1
      %s82 = scalar_select %p79, %s80, %s81
      %p85 = pneg %p79
      %p86 = scmp.eq.s32.totalorder %s18, 1
      %p87 = por %p85, %p86
      %p88 = scmp.ne.s32.totalorder %s80, %s83
      %p89 = scmp.eq.s32.totalorder %s18, 0
      %p90 = por %p88, %p89
      %p91 = scmp.ne.s32.totalorder %s80, %s83
      %p92 = scmp.eq.s32.totalorder %s23, 1
      %p93 = por %p91, %p92
      %p94 = scmp.ne.s32.totalorder %s83, %s84
      %p95 = scmp.eq.s32.totalorder %s23, 0
      %p96 = por %p94, %p95
      %p97 = scmp.ne.s32.totalorder %s83, %s84
      %p98 = scmp.eq.s32.totalorder %s24, 1
      %p99 = por %p97, %p98
      %p101 = scmp.ne.s32.totalorder %s84, %s100
      %p102 = scmp.eq.s32.totalorder %s24, 0
      %p103 = por %p101, %p102
      %s104 = ssub.s32 %s18, %s25
      %p105 = scmp.eq.s32.totalorder %s104, 0
      %s107 = sadd.s32 %s106, 1
      %s108 = scalar_select %p105, %s106, %s107
      %p111 = pneg %p105
      %p112 = scmp.eq.s32.totalorder %s18, 1
      %p113 = por %p111, %p112
      %p114 = scmp.ne.s32.totalorder %s106, %s109
      %p115 = scmp.eq.s32.totalorder %s18, 0
      %p116 = por %p114, %p115
      %p117 = scmp.ne.s32.totalorder %s106, %s109
      %p118 = scmp.eq.s32.totalorder %s23, 1
      %p119 = por %p117, %p118
      %p120 = scmp.ne.s32.totalorder %s109, %s110
      %p121 = scmp.eq.s32.totalorder %s23, 0
      %p122 = por %p120, %p121
      %p123 = scmp.ne.s32.totalorder %s109, %s110
      %p124 = scmp.eq.s32.totalorder %s24, 1
      %p125 = por %p123, %p124
      %p127 = scmp.ne.s32.totalorder %s110, %s126
      %p128 = scmp.eq.s32.totalorder %s24, 0
      %p129 = por %p127, %p128
      %s131 = sadd.s32 %s130, 1
      %p134 = scmp.eq.s32.totalorder %s18, 1
      %p135 = scmp.ne.s32.totalorder %s130, %s132
      %p136 = scmp.eq.s32.totalorder %s18, 0
      %p137 = por %p135, %p136
      %p138 = scmp.ne.s32.totalorder %s130, %s132
      %p139 = scmp.eq.s32.totalorder %s23, 1
      %p140 = por %p138, %p139
      %p141 = scmp.ne.s32.totalorder %s132, %s133
      %p142 = scmp.eq.s32.totalorder %s23, 0
      %p143 = por %p141, %p142
      %p144 = scmp.ne.s32.totalorder %s132, %s133
      %p145 = scmp.eq.s32.totalorder %s24, 1
      %p146 = por %p144, %p145
      %p148 = scmp.ne.s32.totalorder %s133, %s147
      %p149 = scmp.eq.s32.totalorder %s24, 0
      %p150 = por %p148, %p149
      %s152 = sadd.s32 %s151, 1
      %p155 = scmp.eq.s32.totalorder %s18, 1
      %p156 = scmp.ne.s32.totalorder %s151, %s153
      %p157 = scmp.eq.s32.totalorder %s18, 0
      %p158 = por %p156, %p157
      %p159 = scmp.ne.s32.totalorder %s151, %s153
      %p160 = scmp.eq.s32.totalorder %s23, 1
      %p161 = por %p159, %p160
      %p162 = scmp.ne.s32.totalorder %s153, %s154
      %p163 = scmp.eq.s32.totalorder %s23, 0
      %p164 = por %p162, %p163
      %p165 = scmp.ne.s32.totalorder %s153, %s154
      %p166 = scmp.eq.s32.totalorder %s24, 1
      %p167 = por %p165, %p166
      %p169 = scmp.ne.s32.totalorder %s154, %s168
      %p170 = scmp.eq.s32.totalorder %s24, 0
      %p171 = por %p169, %p170
      %s173 = sadd.s32 %s172, 1
      %p176 = scmp.eq.s32.totalorder %s18, 1
      %p177 = scmp.ne.s32.totalorder %s172, %s174
      %p178 = scmp.eq.s32.totalorder %s18, 0
      %p179 = por %p177, %p178
      %p180 = scmp.ne.s32.totalorder %s172, %s174
      %p181 = scmp.eq.s32.totalorder %s23, 1
      %p182 = por %p180, %p181
      %p183 = scmp.ne.s32.totalorder %s174, %s175
      %p184 = scmp.eq.s32.totalorder %s23, 0
      %p185 = por %p183, %p184
      %p186 = scmp.ne.s32.totalorder %s174, %s175
      %p187 = scmp.eq.s32.totalorder %s24, 1
      %p188 = por %p186, %p187
      %p190 = scmp.ne.s32.totalorder %s175, %s189
      %p191 = scmp.eq.s32.totalorder %s24, 0
      %p192 = por %p190, %p191
      %s194 = sadd.s32 %s193, 1
      %p197 = scmp.eq.s32.totalorder %s18, 1
      %p198 = scmp.ne.s32.totalorder %s193, %s195
      %p199 = scmp.eq.s32.totalorder %s18, 0
      %p200 = por %p198, %p199
      %p201 = scmp.ne.s32.totalorder %s193, %s195
      %p202 = scmp.eq.s32.totalorder %s23, 1
      %p203 = por %p201, %p202
      %p204 = scmp.ne.s32.totalorder %s195, %s196
      %p205 = scmp.eq.s32.totalorder %s23, 0
      %p206 = por %p204, %p205
      %p207 = scmp.ne.s32.totalorder %s195, %s196
      %p208 = scmp.eq.s32.totalorder %s24, 1
      %p209 = por %p207, %p208
      %p211 = scmp.ne.s32.totalorder %s196, %s210
      %p212 = scmp.eq.s32.totalorder %s24, 0
      %p213 = por %p211, %p212
      %s215 = sadd.s32 %s214, 1
      %p218 = scmp.eq.s32.totalorder %s18, 1
      %p219 = scmp.ne.s32.totalorder %s214, %s216
      %p220 = scmp.eq.s32.totalorder %s18, 0
      %p221 = por %p219, %p220
      %p222 = scmp.ne.s32.totalorder %s214, %s216
      %p223 = scmp.eq.s32.totalorder %s23, 1
      %p224 = por %p222, %p223
      %p225 = scmp.ne.s32.totalorder %s216, %s217
      %p226 = scmp.eq.s32.totalorder %s23, 0
      %p227 = por %p225, %p226
      %p228 = scmp.ne.s32.totalorder %s216, %s217
      %p229 = scmp.eq.s32.totalorder %s24, 1
      %p230 = por %p228, %p229
      %p232 = scmp.ne.s32.totalorder %s217, %s231
      %p233 = scmp.eq.s32.totalorder %s24, 0
      %p234 = por %p232, %p233
      %s235 = ssub.s32 %s18, %s25
      %p236 = scmp.eq.s32.totalorder %s235, 0
      %s238 = sadd.s32 %s237, 1
      %s239 = scalar_select %p236, %s237, %s238
      %p242 = pneg %p236
      %p243 = scmp.eq.s32.totalorder %s18, 1
      %p244 = por %p242, %p243
      %p245 = scmp.ne.s32.totalorder %s237, %s240
      %p246 = scmp.eq.s32.totalorder %s18, 0
      %p247 = por %p245, %p246
      %p248 = scmp.ne.s32.totalorder %s237, %s240
      %p249 = scmp.eq.s32.totalorder %s23, 1
      %p250 = por %p248, %p249
      %p251 = scmp.ne.s32.totalorder %s240, %s241
      %p252 = scmp.eq.s32.totalorder %s23, 0
      %p253 = por %p251, %p252
      %p254 = scmp.ne.s32.totalorder %s240, %s241
      %p255 = scmp.eq.s32.totalorder %s24, 1
      %p256 = por %p254, %p255
      %p258 = scmp.ne.s32.totalorder %s241, %s257
      %p259 = scmp.eq.s32.totalorder %s24, 0
      %p260 = por %p258, %p259
      %p261 = scmp.le.s32.totalorder 1, %s18
      %p262 = scmp.lt.s32.totalorder %s18, 3
      %p263 = pnand %p261, %p262
      %p264 = pneg %p263
      // Predicated region
      $region9: #{mhsa_ln_res.1} parent=5 // pred_check
        _
      $region10: #{mhsa_ln_res.1} parent=5 // pred_check_branch
        %266 = sbr.rel (%p263) target = $region12
      $region11: #{mhsa_ln_res.1} parent=5 // pred_region
        %s267 = ssub.s32 %s18, 1
        // Predicated region
        $region13: #{mhsa_ln_res.1} parent=11 // pred_check
          %p268 = pneg %p143
        $region14: #{mhsa_ln_res.1} parent=11 // pred_check_branch
          %270 = sbr.rel (%p268) target = $region16
        $region15: #{mhsa_ln_res.1} parent=11 // pred_region
          _
        $region16: #{mhsa_ln_res.1} parent=11 // pred_fallthru
          _
        // Predicated region
        $region17: #{mhsa_ln_res.1} parent=11 // pred_check
          %p271 = pneg %p164
        $region18: #{mhsa_ln_res.1} parent=11 // pred_check_branch
          %273 = sbr.rel (%p271) target = $region20
        $region19: #{mhsa_ln_res.1} parent=11 // pred_region
          _
        $region20: #{mhsa_ln_res.1} parent=11 // pred_fallthru
          _
        // Predicated region
        $region21: #{mhsa_ln_res.1} parent=11 // pred_check
          %p274 = pneg %p185
        $region22: #{mhsa_ln_res.1} parent=11 // pred_check_branch
          %276 = sbr.rel (%p274) target = $region24
        $region23: #{mhsa_ln_res.1} parent=11 // pred_region
          _
        $region24: #{mhsa_ln_res.1} parent=11 // pred_fallthru
          _
        // Predicated region
        $region25: #{mhsa_ln_res.1} parent=11 // pred_check
          %p277 = pneg %p206
        $region26: #{mhsa_ln_res.1} parent=11 // pred_check_branch
          %279 = sbr.rel (%p277) target = $region28
        $region27: #{mhsa_ln_res.1} parent=11 // pred_region
          _
        $region28: #{mhsa_ln_res.1} parent=11 // pred_fallthru
          _
        // Predicated region
        $region29: #{mhsa_ln_res.1} parent=11 // pred_check
          %p280 = pneg %p227
        $region30: #{mhsa_ln_res.1} parent=11 // pred_check_branch
          %282 = sbr.rel (%p280) target = $region32
        $region31: #{mhsa_ln_res.1} parent=11 // pred_region
          _
        $region32: #{mhsa_ln_res.1} parent=11 // pred_fallthru
          _
      $region12: #{mhsa_ln_res.1} parent=5 // pred_fallthru
        _
      %p283 = scmp.lt.s32.totalorder %s18, 2
      // Predicated region
      $region33: #{mhsa_ln_res.1} parent=5 // pred_check
        %p284 = pneg %p283
      $region34: #{mhsa_ln_res.1} parent=5 // pred_check_branch
        %286 = sbr.rel (%p284) target = $region36
      $region35: #{mhsa_ln_res.1} parent=5 // pred_region
        // Predicated region
        $region37: #{mhsa_ln_res.1} parent=35 // pred_check
          %p287 = pneg %p38
        $region38: #{mhsa_ln_res.1} parent=35 // pred_check_branch
          %289 = sbr.rel (%p287) target = $region40
        $region39: #{mhsa_ln_res.1} parent=35 // pred_region
          %s290 = smul.u32 2, %s18
          %p291 = scmp.lt.s32.totalorder %s290, 3
          %s292 = scalar_select %p291, %s290, 3
          %s293 = smul.addr %s292, 8
          %s294 = scalar_lea.vmem %s0, %s293
          %s295 = smul.u32 2, %s18
        $region40: #{mhsa_ln_res.1} parent=35 // pred_fallthru
          _
        // Predicated region
        $region41: #{mhsa_ln_res.1} parent=35 // pred_check
          %p296 = pneg %p64
        $region42: #{mhsa_ln_res.1} parent=35 // pred_check_branch
          %298 = sbr.rel (%p296) target = $region44
        $region43: #{mhsa_ln_res.1} parent=35 // pred_region
          %s299 = smul.u32 2, %s18
          %p300 = scmp.lt.s32.totalorder %s299, 3
          %s301 = scalar_select %p300, %s299, 3
          %s302 = smul.addr %s301, 4
          %s303 = scalar_lea.vmem %s1, %s302
          %s304 = smul.u32 2, %s18
        $region44: #{mhsa_ln_res.1} parent=35 // pred_fallthru
          _
        // Predicated region
        $region45: #{mhsa_ln_res.1} parent=35 // pred_check
          %p305 = pneg %p90
        $region46: #{mhsa_ln_res.1} parent=35 // pred_check_branch
          %307 = sbr.rel (%p305) target = $region48
        $region47: #{mhsa_ln_res.1} parent=35 // pred_region
          %s308 = smul.u32 2, %s18
          %p309 = scmp.lt.s32.totalorder %s308, 3
          %s310 = scalar_select %p309, %s308, 3
          %s311 = smul.addr %s310, 4
          %s312 = scalar_lea.vmem %s2, %s311
          %s313 = smul.u32 2, %s18
        $region48: #{mhsa_ln_res.1} parent=35 // pred_fallthru
          _
        // Predicated region
        $region49: #{mhsa_ln_res.1} parent=35 // pred_check
          %p314 = pneg %p116
        $region50: #{mhsa_ln_res.1} parent=35 // pred_check_branch
          %316 = sbr.rel (%p314) target = $region52
        $region51: #{mhsa_ln_res.1} parent=35 // pred_region
          %s317 = smul.u32 2, %s18
          %p318 = scmp.lt.s32.totalorder %s317, 3
          %s319 = scalar_select %p318, %s317, 3
          %s320 = smul.addr %s319, 4
          %s321 = scalar_lea.vmem %s3, %s320
          %s322 = smul.u32 2, %s18
        $region52: #{mhsa_ln_res.1} parent=35 // pred_fallthru
          _
      $region36: #{mhsa_ln_res.1} parent=5 // pred_fallthru
        _
      %p323 = scmp.le.s32.totalorder 1, %s18
      %p324 = scmp.lt.s32.totalorder %s18, 3
      %p325 = pnand %p323, %p324
      %p326 = pneg %p325
      // Predicated region
      $region53: #{mhsa_ln_res.1} parent=5 // pred_check
        _
      $region54: #{mhsa_ln_res.1} parent=5 // pred_check_branch
        %328 = sbr.rel (%p325) target = $region56
      $region55: #{mhsa_ln_res.1} parent=5 // pred_region
        %s329 = ssub.s32 %s18, 1
        %s330 = smul.u32 2, %s23
        %p331 = scmp.lt.s32.totalorder %s330, 3
        %s332 = scalar_select %p331, %s330, 3
        %s333 = smul.addr %s332, 8
        %s334 = scalar_lea.vmem %s0, %s333
        %p335 = pneg %p44
        %p336 = pneg %p41
        %s337 = smul.u32 2, %s23
        %p338 = scmp.lt.s32.totalorder %s337, 3
        %s339 = scalar_select %p338, %s337, 3
        %s340 = smul.addr %s339, 4
        %s341 = scalar_lea.vmem %s1, %s340
        %p342 = pneg %p70
        %p343 = pneg %p67
        %s344 = smul.u32 2, %s23
        %p345 = scmp.lt.s32.totalorder %s344, 3
        %s346 = scalar_select %p345, %s344, 3
        %s347 = smul.addr %s346, 4
        %s348 = scalar_lea.vmem %s2, %s347
        %p349 = pneg %p96
        %p350 = pneg %p93
        %s351 = smul.u32 2, %s23
        %p352 = scmp.lt.s32.totalorder %s351, 3
        %s353 = scalar_select %p352, %s351, 3
        %s354 = smul.addr %s353, 4
        %s355 = scalar_lea.vmem %s3, %s354
        %p356 = pneg %p122
        %p357 = pneg %p119
        %p358 = pneg %p143
        %p359 = pneg %p140
        %p360 = pneg %p164
        %p361 = pneg %p161
        %p362 = pneg %p185
        %p363 = pneg %p182
        %p364 = pneg %p206
        %p365 = pneg %p203
        %p366 = pneg %p227
        %p367 = pneg %p224
        %p368 = pneg %p253
        %p369 = pneg %p250
        %s370 = sand.u32 %s240, 1
        %s371 = scalar_lea.sflag [#allocation4], %s370
        %s372 = sand.u32 %s240, 1
        %s373 = smul.addr %s372, 16
        %s374 = scalar_lea.vmem [#allocation3], %s373
        %s375 = smul.u32 2, %s23
        %p376 = scmp.lt.s32.totalorder %s375, 3
        %s377 = scalar_select %p376, %s375, 3
        %s378 = smul.addr %s377, 8
        %s379 = scalar_lea.vmem %s0, %s378
        %s380 = smul.u32 2, %s23
        %s381 = smul.u32 2, %s23
        %p382 = scmp.lt.s32.totalorder %s381, 3
        %s383 = scalar_select %p382, %s381, 3
        %s384 = smul.addr %s383, 4
        %s385 = scalar_lea.vmem %s1, %s384
        %s386 = smul.u32 2, %s23
        %s387 = smul.u32 2, %s23
        %p388 = scmp.lt.s32.totalorder %s387, 3
        %s389 = scalar_select %p388, %s387, 3
        %s390 = smul.addr %s389, 4
        %s391 = scalar_lea.vmem %s2, %s390
        %s392 = smul.u32 2, %s23
        %s393 = smul.u32 2, %s23
        %p394 = scmp.lt.s32.totalorder %s393, 3
        %s395 = scalar_select %p394, %s393, 3
        %s396 = smul.addr %s395, 4
        %s397 = scalar_lea.vmem %s3, %s396
        %s398 = smul.u32 2, %s23
        %s399 = smul.u32 2, %s23
        %v401 = vld [vmem:[%s385] sm:$0xf]
        %v402 = vld [vmem:[%s385 + $0x4] sm:$0xf]
        %v403 = vld [vmem:[%s4] sm:$0xf]
        %v404 = vld [vmem:[%s4 + $0x4] sm:$0xf]
        %v405 = vld [vmem:[%s4 + $0x8] sm:$0xf]
        %v406 = vld [vmem:[%s4 + $0xc] sm:$0xf]
        %v407 = vld [vmem:[%s5] sm:$0x1]
        %v408 = vlaneseq
        %v409 = vshrl.u32 %v408, 7
        %v410 = vsub.s32 0, %v409
        %v411 = vrot.slane %v407, %v410
        %v414 = vunpack.c.l.b16 %v401
        %v415 = vunpack.c.l.b16 %v402
        %v416 = vpack.c.b16 %v415, %v414
        %v421 = vunpack.c.l.b16 %v403
        %v422 = vunpack.c.l.b16 %v404
        %v423 = vunpack.c.l.b16 %v405
        %v424 = vunpack.c.l.b16 %v406
        %v425 = vpack.c.b16 %v422, %v421
        %v426 = vpack.c.b16 %v424, %v423
        %vm429 = vcmask 261120
        %v431 = vsel %vm429, %v416, 0
        %433 = vmatprep.subr.bf16.mxu0 0
        %434 = vmatpush1.bf16.msra.mxu0 %v425
        %435 = vmatprep.subr.bf16.mxu0 0
        %436 = vmatpush1.bf16.msra.mxu0 %v426
        %437 = vmatprep.subr.bf16.mxu0 0
        %438 = vmatpush1.bf16.msra.mxu0 0
        %439 = vmatprep.subr.bf16.mxu0 0
        %440 = vmatpush1.bf16.msra.mxu0 0
        %441 = vmatprep.subr.bf16.mxu0 0
        %442 = vmatpush1.bf16.msra.mxu0 0
        %443 = vmatprep.subr.bf16.mxu0 0
        %444 = vmatpush1.bf16.msra.mxu0 0
        %445 = vmatprep.subr.bf16.mxu0 0
        %446 = vmatpush1.bf16.msra.mxu0 0
        %447 = vmatprep.subr.bf16.mxu0 0
        %448 = vmatpush1.bf16.msra.mxu0 0
        %449 = vmatprep.subr.bf16.mxu0 0
        %450 = vmatpush1.bf16.msra.mxu0 0
        %451 = vmatprep.subr.bf16.mxu0 0
        %452 = vmatpush1.bf16.msra.mxu0 0
        %453 = vmatprep.subr.bf16.mxu0 0
        %454 = vmatpush1.bf16.msra.mxu0 0
        %455 = vmatprep.subr.bf16.mxu0 0
        %456 = vmatpush1.bf16.msra.mxu0 0
        %457 = vmatprep.subr.bf16.mxu0 0
        %458 = vmatpush1.bf16.msra.mxu0 0
        %459 = vmatprep.subr.bf16.mxu0 0
        %460 = vmatpush1.bf16.msra.mxu0 0
        %461 = vmatprep.subr.bf16.mxu0 0
        %462 = vmatpush1.bf16.msra.mxu0 0
        %463 = vmatprep.subr.bf16.mxu0 0
        %464 = vmatpush1.bf16.msra.mxu0 0
        %465 = vmatprep.mubr.bf16.mxu0 0
        %466 = vmatmul.mubr.bf16.gmra.mrb[0].mxu0 %v431
        %v467 = vpop.f32.mrb[0].mxu0
        %v468 = vadd.f32 %v411, %v467
        %v469 = vpop.f32.mrb[0].mxu0
        %v470 = vpop.f32.mrb[0].mxu0
        %v471 = vadd.f32 %v411, %v470
        %v472 = vpop.f32.mrb[0].mxu0
        %473 = vdwg.mxu0
        %v474 = vld [vmem:[%s391] sm:$0xf]
        %v475 = vld [vmem:[%s391 + $0x4] sm:$0xf]
        %s476 = scalar_lea.vmem %s4, 16
        %v477 = vld [vmem:[%s476] sm:$0xf]
        %v478 = vld [vmem:[%s476 + $0x4] sm:$0xf]
        %v479 = vld [vmem:[%s476 + $0x8] sm:$0xf]
        %v480 = vld [vmem:[%s476 + $0xc] sm:$0xf]
        %v481 = vld [vmem:[%s5 + $0x1] sm:$0x1]
        %v482 = vlaneseq
        %v483 = vshrl.u32 %v482, 7
        %v484 = vsub.s32 0, %v483
        %v485 = vrot.slane %v481, %v484
        %v488 = vunpack.c.l.b16 %v474
        %v489 = vunpack.c.l.b16 %v475
        %v490 = vpack.c.b16 %v489, %v488
        %v495 = vunpack.c.l.b16 %v477
        %v496 = vunpack.c.l.b16 %v478
        %v497 = vunpack.c.l.b16 %v479
        %v498 = vunpack.c.l.b16 %v480
        %v499 = vpack.c.b16 %v496, %v495
        %v500 = vpack.c.b16 %v498, %v497
        %v504 = vsel %vm429, %v490, 0
        %506 = vmatprep.subr.bf16.mxu0 0
        %507 = vmatpush1.bf16.msra.mxu0 %v499
        %508 = vmatprep.subr.bf16.mxu0 0
        %509 = vmatpush1.bf16.msra.mxu0 %v500
        %510 = vmatprep.subr.bf16.mxu0 0
        %511 = vmatpush1.bf16.msra.mxu0 0
        %512 = vmatprep.subr.bf16.mxu0 0
        %513 = vmatpush1.bf16.msra.mxu0 0
        %514 = vmatprep.subr.bf16.mxu0 0
        %515 = vmatpush1.bf16.msra.mxu0 0
        %516 = vmatprep.subr.bf16.mxu0 0
        %517 = vmatpush1.bf16.msra.mxu0 0
        %518 = vmatprep.subr.bf16.mxu0 0
        %519 = vmatpush1.bf16.msra.mxu0 0
        %520 = vmatprep.subr.bf16.mxu0 0
        %521 = vmatpush1.bf16.msra.mxu0 0
        %522 = vmatprep.subr.bf16.mxu0 0
        %523 = vmatpush1.bf16.msra.mxu0 0
        %524 = vmatprep.subr.bf16.mxu0 0
        %525 = vmatpush1.bf16.msra.mxu0 0
        %526 = vmatprep.subr.bf16.mxu0 0
        %527 = vmatpush1.bf16.msra.mxu0 0
        %528 = vmatprep.subr.bf16.mxu0 0
        %529 = vmatpush1.bf16.msra.mxu0 0
        %530 = vmatprep.subr.bf16.mxu0 0
        %531 = vmatpush1.bf16.msra.mxu0 0
        %532 = vmatprep.subr.bf16.mxu0 0
        %533 = vmatpush1.bf16.msra.mxu0 0
        %534 = vmatprep.subr.bf16.mxu0 0
        %535 = vmatpush1.bf16.msra.mxu0 0
        %536 = vmatprep.subr.bf16.mxu0 0
        %537 = vmatpush1.bf16.msra.mxu0 0
        %538 = vmatprep.mubr.bf16.mxu0 0
        %539 = vmatmul.mubr.bf16.gmra.mrb[0].mxu0 %v504
        %v540 = vpop.f32.mrb[0].mxu0
        %v541 = vadd.f32 %v485, %v540
        %v542 = vpop.f32.mrb[0].mxu0
        %v543 = vpop.f32.mrb[0].mxu0
        %v544 = vadd.f32 %v485, %v543
        %v545 = vpop.f32.mrb[0].mxu0
        %546 = vdwg.mxu0
        %v547 = vld [vmem:[%s397] sm:$0xf]
        %v548 = vld [vmem:[%s397 + $0x4] sm:$0xf]
        %s549 = scalar_lea.vmem %s4, 32
        %v550 = vld [vmem:[%s549] sm:$0xf]
        %v551 = vld [vmem:[%s549 + $0x4] sm:$0xf]
        %v552 = vld [vmem:[%s549 + $0x8] sm:$0xf]
        %v553 = vld [vmem:[%s549 + $0xc] sm:$0xf]
        %v554 = vld [vmem:[%s5 + $0x2] sm:$0x1]
        %v555 = vlaneseq
        %v556 = vshrl.u32 %v555, 7
        %v557 = vsub.s32 0, %v556
        %v558 = vrot.slane %v554, %v557
        %v561 = vunpack.c.l.b16 %v547
        %v562 = vunpack.c.l.b16 %v548
        %v563 = vpack.c.b16 %v562, %v561
        %v568 = vunpack.c.l.b16 %v550
        %v569 = vunpack.c.l.b16 %v551
        %v570 = vunpack.c.l.b16 %v552
        %v571 = vunpack.c.l.b16 %v553
        %v572 = vpack.c.b16 %v569, %v568
        %v573 = vpack.c.b16 %v571, %v570
        %v577 = vsel %vm429, %v563, 0
        %579 = vmatprep.subr.bf16.mxu0 0
        %580 = vmatpush1.bf16.msra.mxu0 %v572
        %581 = vmatprep.subr.bf16.mxu0 0
        %582 = vmatpush1.bf16.msra.mxu0 %v573
        %583 = vmatprep.subr.bf16.mxu0 0
        %584 = vmatpush1.bf16.msra.mxu0 0
        %585 = vmatprep.subr.bf16.mxu0 0
        %586 = vmatpush1.bf16.msra.mxu0 0
        %587 = vmatprep.subr.bf16.mxu0 0
        %588 = vmatpush1.bf16.msra.mxu0 0
        %589 = vmatprep.subr.bf16.mxu0 0
        %590 = vmatpush1.bf16.msra.mxu0 0
        %591 = vmatprep.subr.bf16.mxu0 0
        %592 = vmatpush1.bf16.msra.mxu0 0
        %593 = vmatprep.subr.bf16.mxu0 0
        %594 = vmatpush1.bf16.msra.mxu0 0
        %595 = vmatprep.subr.bf16.mxu0 0
        %596 = vmatpush1.bf16.msra.mxu0 0
        %597 = vmatprep.subr.bf16.mxu0 0
        %598 = vmatpush1.bf16.msra.mxu0 0
        %599 = vmatprep.subr.bf16.mxu0 0
        %600 = vmatpush1.bf16.msra.mxu0 0
        %601 = vmatprep.subr.bf16.mxu0 0
        %602 = vmatpush1.bf16.msra.mxu0 0
        %603 = vmatprep.subr.bf16.mxu0 0
        %604 = vmatpush1.bf16.msra.mxu0 0
        %605 = vmatprep.subr.bf16.mxu0 0
        %606 = vmatpush1.bf16.msra.mxu0 0
        %607 = vmatprep.subr.bf16.mxu0 0
        %608 = vmatpush1.bf16.msra.mxu0 0
        %609 = vmatprep.subr.bf16.mxu0 0
        %610 = vmatpush1.bf16.msra.mxu0 0
        %611 = vmatprep.mubr.bf16.mxu0 0
        %612 = vmatmul.mubr.bf16.gmra.mrb[0].mxu0 %v577
        %v613 = vpop.f32.mrb[0].mxu0
        %v614 = vadd.f32 %v558, %v613
        %v615 = vpop.f32.mrb[0].mxu0
        %v616 = vpop.f32.mrb[0].mxu0
        %v617 = vadd.f32 %v558, %v616
        %v618 = vpop.f32.mrb[0].mxu0
        %619 = vdwg.mxu0
        %v620 = vpack.c.bf16 %v468, %v468
        %v621 = vpack.c.bf16 %v471, %v471
        %v622 = vpack.c.bf16 %v541, %v541
        %v623 = vpack.c.bf16 %v544, %v544
        %v624 = vpack.c.bf16 %v614, %v614
        %v625 = vpack.c.bf16 %v617, %v617
        %vm626 = vcmask 64512
        %v628 = vsel %vm626, %v620, 0
        %v631 = vsel %vm626, %v622, 0
        %633 = vmatprep.subr.bf16.mxu0 0
        %634 = vmatpush1.bf16.xpose.msra.mxu0 %v631
        %635 = vmatprep.subr.bf16.mxu0 0
        %636 = vmatpush1.bf16.xpose.msra.mxu0 0
        %637 = vmatprep.subr.bf16.mxu0 0
        %638 = vmatpush1.bf16.xpose.msra.mxu0 0
        %639 = vmatprep.subr.bf16.mxu0 0
        %640 = vmatpush1.bf16.xpose.msra.mxu0 0
        %641 = vmatprep.subr.bf16.mxu0 0
        %642 = vmatpush1.bf16.xpose.msra.mxu0 0
        %643 = vmatprep.subr.bf16.mxu0 0
        %644 = vmatpush1.bf16.xpose.msra.mxu0 0
        %645 = vmatprep.subr.bf16.mxu0 0
        %646 = vmatpush1.bf16.xpose.msra.mxu0 0
        %647 = vmatprep.subr.bf16.mxu0 0
        %648 = vmatpush1.bf16.xpose.msra.mxu0 0
        %649 = vmatprep.subr.bf16.mxu0 0
        %650 = vmatpush1.bf16.xpose.msra.mxu0 0
        %651 = vmatprep.subr.bf16.mxu0 0
        %652 = vmatpush1.bf16.xpose.msra.mxu0 0
        %653 = vmatprep.subr.bf16.mxu0 0
        %654 = vmatpush1.bf16.xpose.msra.mxu0 0
        %655 = vmatprep.subr.bf16.mxu0 0
        %656 = vmatpush1.bf16.xpose.msra.mxu0 0
        %657 = vmatprep.subr.bf16.mxu0 0
        %658 = vmatpush1.bf16.xpose.msra.mxu0 0
        %659 = vmatprep.subr.bf16.mxu0 0
        %660 = vmatpush1.bf16.xpose.msra.mxu0 0
        %661 = vmatprep.subr.bf16.mxu0 0
        %662 = vmatpush1.bf16.xpose.msra.mxu0 0
        %663 = vmatprep.subr.bf16.mxu0 0
        %664 = vmatpush1.bf16.xpose.msra.mxu0 0
        %665 = vmatprep.mubr.bf16.mxu0 0
        %666 = vmatmul.mubr.bf16.gmra.mrb[0].mxu0 %v628
        %v667 = vpop.f32.mrb[0].mxu0
        %v668 = vadd.f32 0.0, %v667
        %v669 = vpop.f32.mrb[0].mxu0
        %v670 = vpop.f32.mrb[0].mxu0
        %v671 = vpop.f32.mrb[0].mxu0
        %672 = vdwg.mxu0
        %v674 = vsel %vm626, %v621, 0
        %v677 = vsel %vm626, %v623, 0
        %679 = vmatprep.subr.bf16.mxu0 0
        %680 = vmatpush1.bf16.xpose.msra.mxu0 %v677
        %681 = vmatprep.subr.bf16.mxu0 0
        %682 = vmatpush1.bf16.xpose.msra.mxu0 0
        %683 = vmatprep.subr.bf16.mxu0 0
        %684 = vmatpush1.bf16.xpose.msra.mxu0 0
        %685 = vmatprep.subr.bf16.mxu0 0
        %686 = vmatpush1.bf16.xpose.msra.mxu0 0
        %687 = vmatprep.subr.bf16.mxu0 0
        %688 = vmatpush1.bf16.xpose.msra.mxu0 0
        %689 = vmatprep.subr.bf16.mxu0 0
        %690 = vmatpush1.bf16.xpose.msra.mxu0 0
        %691 = vmatprep.subr.bf16.mxu0 0
        %692 = vmatpush1.bf16.xpose.msra.mxu0 0
        %693 = vmatprep.subr.bf16.mxu0 0
        %694 = vmatpush1.bf16.xpose.msra.mxu0 0
        %695 = vmatprep.subr.bf16.mxu0 0
        %696 = vmatpush1.bf16.xpose.msra.mxu0 0
        %697 = vmatprep.subr.bf16.mxu0 0
        %698 = vmatpush1.bf16.xpose.msra.mxu0 0
        %699 = vmatprep.subr.bf16.mxu0 0
        %700 = vmatpush1.bf16.xpose.msra.mxu0 0
        %701 = vmatprep.subr.bf16.mxu0 0
        %702 = vmatpush1.bf16.xpose.msra.mxu0 0
        %703 = vmatprep.subr.bf16.mxu0 0
        %704 = vmatpush1.bf16.xpose.msra.mxu0 0
        %705 = vmatprep.subr.bf16.mxu0 0
        %706 = vmatpush1.bf16.xpose.msra.mxu0 0
        %707 = vmatprep.subr.bf16.mxu0 0
        %708 = vmatpush1.bf16.xpose.msra.mxu0 0
        %709 = vmatprep.subr.bf16.mxu0 0
        %710 = vmatpush1.bf16.xpose.msra.mxu0 0
        %711 = vmatprep.mubr.bf16.mxu0 0
        %712 = vmatmul.mubr.bf16.gmra.mrb[0].mxu0 %v674
        %v713 = vpop.f32.mrb[0].mxu0
        %v714 = vadd.f32 0.0, %v713
        %v715 = vpop.f32.mrb[0].mxu0
        %v716 = vpop.f32.mrb[0].mxu0
        %v717 = vpop.f32.mrb[0].mxu0
        %718 = vdwg.mxu0
        %v719 = vsel %vm626, %v668, -inf
        %720 = vmax.xlane.f32.xlu0 %v719
        %v721 = vpop.xlane.xlu0 %720
        %v722 = vsel %vm626, %v714, -inf
        %723 = vmax.xlane.f32.xlu0 %v722
        %v724 = vpop.xlane.xlu0 %723
        %v725 = vsub.f32 %v668, %v721
        %v726 = vsub.f32 %v714, %v724
        %v727 = vmul.f32 %v725, 1.442695
        %v728 = vpow.pop %v727
        %v729 = vmul.f32 %v726, 1.442695
        %v730 = vpow.pop %v729
        %v731 = vsel %vm626, %v728, 0.0
        %732 = vadd.xlane.f32.xlu0 %v731
        %v733 = vpop.xlane.xlu0 %732
        %v734 = vsel %vm626, %v730, 0.0
        %735 = vadd.xlane.f32.xlu0 %v734
        %v736 = vpop.xlane.xlu0 %735
        %v737 = vrcp.pop %v733
        %v738 = vrcp.pop %v736
        %v739 = vmul.f32 %v728, %v737
        %v740 = vmul.f32 %v730, %v738
        %v741 = vpack.c.bf16 %v739, %v739
        %v742 = vpack.c.bf16 %v740, %v740
        %v744 = vsel %vm626, %v741, 0
        %vm746 = vcmask 1043456
        %v748 = vsel %vm746, %v624, 0
        %750 = vmatprep.subr.bf16.mxu0 0
        %751 = vmatpush1.bf16.msra.mxu0 %v748
        %752 = vmatprep.subr.bf16.mxu0 0
        %753 = vmatpush1.bf16.msra.mxu0 0
        %754 = vmatprep.subr.bf16.mxu0 0
        %755 = vmatpush1.bf16.msra.mxu0 0
        %756 = vmatprep.subr.bf16.mxu0 0
        %757 = vmatpush1.bf16.msra.mxu0 0
        %758 = vmatprep.subr.bf16.mxu0 0
        %759 = vmatpush1.bf16.msra.mxu0 0
        %760 = vmatprep.subr.bf16.mxu0 0
        %761 = vmatpush1.bf16.msra.mxu0 0
        %762 = vmatprep.subr.bf16.mxu0 0
        %763 = vmatpush1.bf16.msra.mxu0 0
        %764 = vmatprep.subr.bf16.mxu0 0
        %765 = vmatpush1.bf16.msra.mxu0 0
        %766 = vmatprep.subr.bf16.mxu0 0
        %767 = vmatpush1.bf16.msra.mxu0 0
        %768 = vmatprep.subr.bf16.mxu0 0
        %769 = vmatpush1.bf16.msra.mxu0 0
        %770 = vmatprep.subr.bf16.mxu0 0
        %771 = vmatpush1.bf16.msra.mxu0 0
        %772 = vmatprep.subr.bf16.mxu0 0
        %773 = vmatpush1.bf16.msra.mxu0 0
        %774 = vmatprep.subr.bf16.mxu0 0
        %775 = vmatpush1.bf16.msra.mxu0 0
        %776 = vmatprep.subr.bf16.mxu0 0
        %777 = vmatpush1.bf16.msra.mxu0 0
        %778 = vmatprep.subr.bf16.mxu0 0
        %779 = vmatpush1.bf16.msra.mxu0 0
        %780 = vmatprep.subr.bf16.mxu0 0
        %781 = vmatpush1.bf16.msra.mxu0 0
        %782 = vmatprep.mubr.bf16.mxu0 0
        %783 = vmatmul.mubr.bf16.gmra.mrb[0].mxu0 %v744
        %v784 = vpop.f32.mrb[0].mxu0
        %v785 = vadd.f32 0.0, %v784
        %v786 = vpop.f32.mrb[0].mxu0
        %v787 = vpop.f32.mrb[0].mxu0
        %v788 = vpop.f32.mrb[0].mxu0
        %789 = vdwg.mxu0
        %v791 = vsel %vm626, %v742, 0
        %v794 = vsel %vm746, %v625, 0
        %796 = vmatprep.subr.bf16.mxu0 0
        %797 = vmatpush1.bf16.msra.mxu0 %v794
        %798 = vmatprep.subr.bf16.mxu0 0
        %799 = vmatpush1.bf16.msra.mxu0 0
        %800 = vmatprep.subr.bf16.mxu0 0
        %801 = vmatpush1.bf16.msra.mxu0 0
        %802 = vmatprep.subr.bf16.mxu0 0
        %803 = vmatpush1.bf16.msra.mxu0 0
        %804 = vmatprep.subr.bf16.mxu0 0
        %805 = vmatpush1.bf16.msra.mxu0 0
        %806 = vmatprep.subr.bf16.mxu0 0
        %807 = vmatpush1.bf16.msra.mxu0 0
        %808 = vmatprep.subr.bf16.mxu0 0
        %809 = vmatpush1.bf16.msra.mxu0 0
        %810 = vmatprep.subr.bf16.mxu0 0
        %811 = vmatpush1.bf16.msra.mxu0 0
        %812 = vmatprep.subr.bf16.mxu0 0
        %813 = vmatpush1.bf16.msra.mxu0 0
        %814 = vmatprep.subr.bf16.mxu0 0
        %815 = vmatpush1.bf16.msra.mxu0 0
        %816 = vmatprep.subr.bf16.mxu0 0
        %817 = vmatpush1.bf16.msra.mxu0 0
        %818 = vmatprep.subr.bf16.mxu0 0
        %819 = vmatpush1.bf16.msra.mxu0 0
        %820 = vmatprep.subr.bf16.mxu0 0
        %821 = vmatpush1.bf16.msra.mxu0 0
        %822 = vmatprep.subr.bf16.mxu0 0
        %823 = vmatpush1.bf16.msra.mxu0 0
        %824 = vmatprep.subr.bf16.mxu0 0
        %825 = vmatpush1.bf16.msra.mxu0 0
        %826 = vmatprep.subr.bf16.mxu0 0
        %827 = vmatpush1.bf16.msra.mxu0 0
        %828 = vmatprep.mubr.bf16.mxu0 0
        %829 = vmatmul.mubr.bf16.gmra.mrb[0].mxu0 %v791
        %v830 = vpop.f32.mrb[0].mxu0
        %v831 = vadd.f32 0.0, %v830
        %v832 = vpop.f32.mrb[0].mxu0
        %v833 = vpop.f32.mrb[0].mxu0
        %v834 = vpop.f32.mrb[0].mxu0
        %835 = vdwg.mxu0
        %v836 = vpack.c.bf16 %v785, %v785
        %v837 = vpack.c.bf16 %v831, %v831
        %vm838 = vcmask 60416
        %839 = vst.msk [vmem:[#allocation2] sm:$0xf] %vm838, %v836
        %840 = vst.msk [vmem:[#allocation2 + $0x4] sm:$0xf] %vm838, %v837
        %842 = vrot.lane.b32.xlu0 %v620, 120
        %v843 = vpop.permute.xlu0 %842
        %845 = vrot.lane.b32.xlu0 %v622, 120
        %v846 = vpop.permute.xlu0 %845
        %v848 = vsel %vm626, %v843, 0
        %v851 = vsel %vm626, %v846, 0
        %853 = vmatprep.subr.bf16.mxu0 0
        %854 = vmatpush1.bf16.xpose.msra.mxu0 %v851
        %855 = vmatprep.subr.bf16.mxu0 0
        %856 = vmatpush1.bf16.xpose.msra.mxu0 0
        %857 = vmatprep.subr.bf16.mxu0 0
        %858 = vmatpush1.bf16.xpose.msra.mxu0 0
        %859 = vmatprep.subr.bf16.mxu0 0
        %860 = vmatpush1.bf16.xpose.msra.mxu0 0
        %861 = vmatprep.subr.bf16.mxu0 0
        %862 = vmatpush1.bf16.xpose.msra.mxu0 0
        %863 = vmatprep.subr.bf16.mxu0 0
        %864 = vmatpush1.bf16.xpose.msra.mxu0 0
        %865 = vmatprep.subr.bf16.mxu0 0
        %866 = vmatpush1.bf16.xpose.msra.mxu0 0
        %867 = vmatprep.subr.bf16.mxu0 0
        %868 = vmatpush1.bf16.xpose.msra.mxu0 0
        %869 = vmatprep.subr.bf16.mxu0 0
        %870 = vmatpush1.bf16.xpose.msra.mxu0 0
        %871 = vmatprep.subr.bf16.mxu0 0
        %872 = vmatpush1.bf16.xpose.msra.mxu0 0
        %873 = vmatprep.subr.bf16.mxu0 0
        %874 = vmatpush1.bf16.xpose.msra.mxu0 0
        %875 = vmatprep.subr.bf16.mxu0 0
        %876 = vmatpush1.bf16.xpose.msra.mxu0 0
        %877 = vmatprep.subr.bf16.mxu0 0
        %878 = vmatpush1.bf16.xpose.msra.mxu0 0
        %879 = vmatprep.subr.bf16.mxu0 0
        %880 = vmatpush1.bf16.xpose.msra.mxu0 0
        %881 = vmatprep.subr.bf16.mxu0 0
        %882 = vmatpush1.bf16.xpose.msra.mxu0 0
        %883 = vmatprep.subr.bf16.mxu0 0
        %884 = vmatpush1.bf16.xpose.msra.mxu0 0
        %885 = vmatprep.mubr.bf16.mxu0 0
        %886 = vmatmul.mubr.bf16.gmra.mrb[0].mxu0 %v848
        %v887 = vpop.f32.mrb[0].mxu0
        %v888 = vadd.f32 0.0, %v887
        %v889 = vpop.f32.mrb[0].mxu0
        %v890 = vpop.f32.mrb[0].mxu0
        %v891 = vpop.f32.mrb[0].mxu0
        %892 = vdwg.mxu0
        %894 = vrot.lane.b32.xlu0 %v621, 120
        %v895 = vpop.permute.xlu0 %894
        %897 = vrot.lane.b32.xlu0 %v623, 120
        %v898 = vpop.permute.xlu0 %897
        %v900 = vsel %vm626, %v895, 0
        %v903 = vsel %vm626, %v898, 0
        %905 = vmatprep.subr.bf16.mxu0 0
        %906 = vmatpush1.bf16.xpose.msra.mxu0 %v903
        %907 = vmatprep.subr.bf16.mxu0 0
        %908 = vmatpush1.bf16.xpose.msra.mxu0 0
        %909 = vmatprep.subr.bf16.mxu0 0
        %910 = vmatpush1.bf16.xpose.msra.mxu0 0
        %911 = vmatprep.subr.bf16.mxu0 0
        %912 = vmatpush1.bf16.xpose.msra.mxu0 0
        %913 = vmatprep.subr.bf16.mxu0 0
        %914 = vmatpush1.bf16.xpose.msra.mxu0 0
        %915 = vmatprep.subr.bf16.mxu0 0
        %916 = vmatpush1.bf16.xpose.msra.mxu0 0
        %917 = vmatprep.subr.bf16.mxu0 0
        %918 = vmatpush1.bf16.xpose.msra.mxu0 0
        %919 = vmatprep.subr.bf16.mxu0 0
        %920 = vmatpush1.bf16.xpose.msra.mxu0 0
        %921 = vmatprep.subr.bf16.mxu0 0
        %922 = vmatpush1.bf16.xpose.msra.mxu0 0
        %923 = vmatprep.subr.bf16.mxu0 0
        %924 = vmatpush1.bf16.xpose.msra.mxu0 0
        %925 = vmatprep.subr.bf16.mxu0 0
        %926 = vmatpush1.bf16.xpose.msra.mxu0 0
        %927 = vmatprep.subr.bf16.mxu0 0
        %928 = vmatpush1.bf16.xpose.msra.mxu0 0
        %929 = vmatprep.subr.bf16.mxu0 0
        %930 = vmatpush1.bf16.xpose.msra.mxu0 0
        %931 = vmatprep.subr.bf16.mxu0 0
        %932 = vmatpush1.bf16.xpose.msra.mxu0 0
        %933 = vmatprep.subr.bf16.mxu0 0
        %934 = vmatpush1.bf16.xpose.msra.mxu0 0
        %935 = vmatprep.subr.bf16.mxu0 0
        %936 = vmatpush1.bf16.xpose.msra.mxu0 0
        %937 = vmatprep.mubr.bf16.mxu0 0
        %938 = vmatmul.mubr.bf16.gmra.mrb[0].mxu0 %v900
        %v939 = vpop.f32.mrb[0].mxu0
        %v940 = vadd.f32 0.0, %v939
        %v941 = vpop.f32.mrb[0].mxu0
        %v942 = vpop.f32.mrb[0].mxu0
        %v943 = vpop.f32.mrb[0].mxu0
        %944 = vdwg.mxu0
        %v945 = vsel %vm626, %v888, -inf
        %946 = vmax.xlane.f32.xlu0 %v945
        %v947 = vpop.xlane.xlu0 %946
        %v948 = vsel %vm626, %v940, -inf
        %949 = vmax.xlane.f32.xlu0 %v948
        %v950 = vpop.xlane.xlu0 %949
        %v951 = vsub.f32 %v888, %v947
        %v952 = vsub.f32 %v940, %v950
        %v953 = vmul.f32 %v951, 1.442695
        %v954 = vpow.pop %v953
        %v955 = vmul.f32 %v952, 1.442695
        %v956 = vpow.pop %v955
        %v957 = vsel %vm626, %v954, 0.0
        %958 = vadd.xlane.f32.xlu0 %v957
        %v959 = vpop.xlane.xlu0 %958
        %v960 = vsel %vm626, %v956, 0.0
        %961 = vadd.xlane.f32.xlu0 %v960
        %v962 = vpop.xlane.xlu0 %961
        %v963 = vrcp.pop %v959
        %v964 = vrcp.pop %v962
        %v965 = vmul.f32 %v954, %v963
        %v966 = vmul.f32 %v956, %v964
        %v967 = vpack.c.bf16 %v965, %v965
        %v968 = vpack.c.bf16 %v966, %v966
        %970 = vrot.lane.b32.xlu0 %v624, 120
        %v971 = vpop.permute.xlu0 %970
        %v973 = vsel %vm626, %v967, 0
        %v976 = vsel %vm746, %v971, 0
        %978 = vmatprep.subr.bf16.mxu0 0
        %979 = vmatpush1.bf16.msra.mxu0 %v976
        %980 = vmatprep.subr.bf16.mxu0 0
        %981 = vmatpush1.bf16.msra.mxu0 0
        %982 = vmatprep.subr.bf16.mxu0 0
        %983 = vmatpush1.bf16.msra.mxu0 0
        %984 = vmatprep.subr.bf16.mxu0 0
        %985 = vmatpush1.bf16.msra.mxu0 0
        %986 = vmatprep.subr.bf16.mxu0 0
        %987 = vmatpush1.bf16.msra.mxu0 0
        %988 = vmatprep.subr.bf16.mxu0 0
        %989 = vmatpush1.bf16.msra.mxu0 0
        %990 = vmatprep.subr.bf16.mxu0 0
        %991 = vmatpush1.bf16.msra.mxu0 0
        %992 = vmatprep.subr.bf16.mxu0 0
        %993 = vmatpush1.bf16.msra.mxu0 0
        %994 = vmatprep.subr.bf16.mxu0 0
        %995 = vmatpush1.bf16.msra.mxu0 0
        %996 = vmatprep.subr.bf16.mxu0 0
        %997 = vmatpush1.bf16.msra.mxu0 0
        %998 = vmatprep.subr.bf16.mxu0 0
        %999 = vmatpush1.bf16.msra.mxu0 0
        %1000 = vmatprep.subr.bf16.mxu0 0
        %1001 = vmatpush1.bf16.msra.mxu0 0
        %1002 = vmatprep.subr.bf16.mxu0 0
        %1003 = vmatpush1.bf16.msra.mxu0 0
        %1004 = vmatprep.subr.bf16.mxu0 0
        %1005 = vmatpush1.bf16.msra.mxu0 0
        %1006 = vmatprep.subr.bf16.mxu0 0
        %1007 = vmatpush1.bf16.msra.mxu0 0
        %1008 = vmatprep.subr.bf16.mxu0 0
        %1009 = vmatpush1.bf16.msra.mxu0 0
        %1010 = vmatprep.mubr.bf16.mxu0 0
        %1011 = vmatmul.mubr.bf16.gmra.mrb[0].mxu0 %v973
        %v1012 = vpop.f32.mrb[0].mxu0
        %v1013 = vadd.f32 0.0, %v1012
        %v1014 = vpop.f32.mrb[0].mxu0
        %v1015 = vpop.f32.mrb[0].mxu0
        %v1016 = vpop.f32.mrb[0].mxu0
        %1017 = vdwg.mxu0
        %1019 = vrot.lane.b32.xlu0 %v625, 120
        %v1020 = vpop.permute.xlu0 %1019
        %v1022 = vsel %vm626, %v968, 0
        %v1025 = vsel %vm746, %v1020, 0
        %1027 = vmatprep.subr.bf16.mxu0 0
        %1028 = vmatpush1.bf16.msra.mxu0 %v1025
        %1029 = vmatprep.subr.bf16.mxu0 0
        %1030 = vmatpush1.bf16.msra.mxu0 0
        %1031 = vmatprep.subr.bf16.mxu0 0
        %1032 = vmatpush1.bf16.msra.mxu0 0
        %1033 = vmatprep.subr.bf16.mxu0 0
        %1034 = vmatpush1.bf16.msra.mxu0 0
        %1035 = vmatprep.subr.bf16.mxu0 0
        %1036 = vmatpush1.bf16.msra.mxu0 0
        %1037 = vmatprep.subr.bf16.mxu0 0
        %1038 = vmatpush1.bf16.msra.mxu0 0
        %1039 = vmatprep.subr.bf16.mxu0 0
        %1040 = vmatpush1.bf16.msra.mxu0 0
        %1041 = vmatprep.subr.bf16.mxu0 0
        %1042 = vmatpush1.bf16.msra.mxu0 0
        %1043 = vmatprep.subr.bf16.mxu0 0
        %1044 = vmatpush1.bf16.msra.mxu0 0
        %1045 = vmatprep.subr.bf16.mxu0 0
        %1046 = vmatpush1.bf16.msra.mxu0 0
        %1047 = vmatprep.subr.bf16.mxu0 0
        %1048 = vmatpush1.bf16.msra.mxu0 0
        %1049 = vmatprep.subr.bf16.mxu0 0
        %1050 = vmatpush1.bf16.msra.mxu0 0
        %1051 = vmatprep.subr.bf16.mxu0 0
        %1052 = vmatpush1.bf16.msra.mxu0 0
        %1053 = vmatprep.subr.bf16.mxu0 0
        %1054 = vmatpush1.bf16.msra.mxu0 0
        %1055 = vmatprep.subr.bf16.mxu0 0
        %1056 = vmatpush1.bf16.msra.mxu0 0
        %1057 = vmatprep.subr.bf16.mxu0 0
        %1058 = vmatpush1.bf16.msra.mxu0 0
        %1059 = vmatprep.mubr.bf16.mxu0 0
        %1060 = vmatmul.mubr.bf16.gmra.mrb[0].mxu0 %v1022
        %v1061 = vpop.f32.mrb[0].mxu0
        %v1062 = vadd.f32 0.0, %v1061
        %v1063 = vpop.f32.mrb[0].mxu0
        %v1064 = vpop.f32.mrb[0].mxu0
        %v1065 = vpop.f32.mrb[0].mxu0
        %1066 = vdwg.mxu0
        %v1067 = vpack.c.bf16 %v1013, %v1013
        %v1068 = vpack.c.bf16 %v1062, %v1062
        %v1071 = vunpack.c.l.b16 %v1067
        %v1072 = vunpack.c.l.b16 %v1068
        %v1073 = vpack.c.b16 %v1071, %v1071
        %v1074 = vpack.c.b16 %v1072, %v1072
        %1075 = vrot.lane.b32.xlu0 %v1073, 8
        %v1076 = vpop.permute.xlu0 %1075
        %1077 = vrot.lane.b32.xlu0 %v1074, 8
        %v1078 = vpop.permute.xlu0 %1077
        %vm1081 = vcmask 126016
        %1082 = vst.msk [vmem:[#allocation2] sm:$0xf] %vm1081, %v1076
        %1083 = vst.msk [vmem:[#allocation2 + $0x4] sm:$0xf] %vm1081, %v1078
        %1084 = vrot.lane.b32.xlu0 %v620, 112
        %v1085 = vpop.permute.xlu0 %1084
        %1086 = vrot.lane.b32.xlu0 %v622, 112
        %v1087 = vpop.permute.xlu0 %1086
        %v1089 = vsel %vm626, %v1085, 0
        %v1092 = vsel %vm626, %v1087, 0
        %1094 = vmatprep.subr.bf16.mxu0 0
        %1095 = vmatpush1.bf16.xpose.msra.mxu0 %v1092
        %1096 = vmatprep.subr.bf16.mxu0 0
        %1097 = vmatpush1.bf16.xpose.msra.mxu0 0
        %1098 = vmatprep.subr.bf16.mxu0 0
        %1099 = vmatpush1.bf16.xpose.msra.mxu0 0
        %1100 = vmatprep.subr.bf16.mxu0 0
        %1101 = vmatpush1.bf16.xpose.msra.mxu0 0
        %1102 = vmatprep.subr.bf16.mxu0 0
        %1103 = vmatpush1.bf16.xpose.msra.mxu0 0
        %1104 = vmatprep.subr.bf16.mxu0 0
        %1105 = vmatpush1.bf16.xpose.msra.mxu0 0
        %1106 = vmatprep.subr.bf16.mxu0 0
        %1107 = vmatpush1.bf16.xpose.msra.mxu0 0
        %1108 = vmatprep.subr.bf16.mxu0 0
        %1109 = vmatpush1.bf16.xpose.msra.mxu0 0
        %1110 = vmatprep.subr.bf16.mxu0 0
        %1111 = vmatpush1.bf16.xpose.msra.mxu0 0
        %1112 = vmatprep.subr.bf16.mxu0 0
        %1113 = vmatpush1.bf16.xpose.msra.mxu0 0
        %1114 = vmatprep.subr.bf16.mxu0 0
        %1115 = vmatpush1.bf16.xpose.msra.mxu0 0
        %1116 = vmatprep.subr.bf16.mxu0 0
        %1117 = vmatpush1.bf16.xpose.msra.mxu0 0
        %1118 = vmatprep.subr.bf16.mxu0 0
        %1119 = vmatpush1.bf16.xpose.msra.mxu0 0
        %1120 = vmatprep.subr.bf16.mxu0 0
        %1121 = vmatpush1.bf16.xpose.msra.mxu0 0
        %1122 = vmatprep.subr.bf16.mxu0 0
        %1123 = vmatpush1.bf16.xpose.msra.mxu0 0
        %1124 = vmatprep.subr.bf16.mxu0 0
        %1125 = vmatpush1.bf16.xpose.msra.mxu0 0
        %1126 = vmatprep.mubr.bf16.mxu0 0
        %1127 = vmatmul.mubr.bf16.gmra.mrb[0].mxu0 %v1089
        %v1128 = vpop.f32.mrb[0].mxu0
        %v1129 = vadd.f32 0.0, %v1128
        %v1130 = vpop.f32.mrb[0].mxu0
        %v1131 = vpop.f32.mrb[0].mxu0
        %v1132 = vpop.f32.mrb[0].mxu0
        %1133 = vdwg.mxu0
        %1134 = vrot.lane.b32.xlu0 %v621, 112
        %v1135 = vpop.permute.xlu0 %1134
        %1136 = vrot.lane.b32.xlu0 %v623, 112
        %v1137 = vpop.permute.xlu0 %1136
        %v1139 = vsel %vm626, %v1135, 0
        %v1142 = vsel %vm626, %v1137, 0
        %1144 = vmatprep.subr.bf16.mxu0 0
        %1145 = vmatpush1.bf16.xpose.msra.mxu0 %v1142
        %1146 = vmatprep.subr.bf16.mxu0 0
        %1147 = vmatpush1.bf16.xpose.msra.mxu0 0
        %1148 = vmatprep.subr.bf16.mxu0 0
        %1149 = vmatpush1.bf16.xpose.msra.mxu0 0
        %1150 = vmatprep.subr.bf16.mxu0 0
        %1151 = vmatpush1.bf16.xpose.msra.mxu0 0
        %1152 = vmatprep.subr.bf16.mxu0 0
        %1153 = vmatpush1.bf16.xpose.msra.mxu0 0
        %1154 = vmatprep.subr.bf16.mxu0 0
        %1155 = vmatpush1.bf16.xpose.msra.mxu0 0
        %1156 = vmatprep.subr.bf16.mxu0 0
        %1157 = vmatpush1.bf16.xpose.msra.mxu0 0
        %1158 = vmatprep.subr.bf16.mxu0 0
        %1159 = vmatpush1.bf16.xpose.msra.mxu0 0
        %1160 = vmatprep.subr.bf16.mxu0 0
        %1161 = vmatpush1.bf16.xpose.msra.mxu0 0
        %1162 = vmatprep.subr.bf16.mxu0 0
        %1163 = vmatpush1.bf16.xpose.msra.mxu0 0
        %1164 = vmatprep.subr.bf16.mxu0 0
        %1165 = vmatpush1.bf16.xpose.msra.mxu0 0
        %1166 = vmatprep.subr.bf16.mxu0 0
        %1167 = vmatpush1.bf16.xpose.msra.mxu0 0
        %1168 = vmatprep.subr.bf16.mxu0 0
        %1169 = vmatpush1.bf16.xpose.msra.mxu0 0
        %1170 = vmatprep.subr.bf16.mxu0 0
        %1171 = vmatpush1.bf16.xpose.msra.mxu0 0
        %1172 = vmatprep.subr.bf16.mxu0 0
        %1173 = vmatpush1.bf16.xpose.msra.mxu0 0
        %1174 = vmatprep.subr.bf16.mxu0 0
        %1175 = vmatpush1.bf16.xpose.msra.mxu0 0
        %1176 = vmatprep.mubr.bf16.mxu0 0
        %1177 = vmatmul.mubr.bf16.gmra.mrb[0].mxu0 %v1139
        %v1178 = vpop.f32.mrb[0].mxu0
        %v1179 = vadd.f32 0.0, %v1178
        %v1180 = vpop.f32.mrb[0].mxu0
        %v1181 = vpop.f32.mrb[0].mxu0
        %v1182 = vpop.f32.mrb[0].mxu0
        %1183 = vdwg.mxu0
        %v1184 = vsel %vm626, %v1129, -inf
        %1185 = vmax.xlane.f32.xlu0 %v1184
        %v1186 = vpop.xlane.xlu0 %1185
        %v1187 = vsel %vm626, %v1179, -inf
        %1188 = vmax.xlane.f32.xlu0 %v1187
        %v1189 = vpop.xlane.xlu0 %1188
        %v1190 = vsub.f32 %v1129, %v1186
        %v1191 = vsub.f32 %v1179, %v1189
        %v1192 = vmul.f32 %v1190, 1.442695
        %v1193 = vpow.pop %v1192
        %v1194 = vmul.f32 %v1191, 1.442695
        %v1195 = vpow.pop %v1194
        %v1196 = vsel %vm626, %v1193, 0.0
        %1197 = vadd.xlane.f32.xlu0 %v1196
        %v1198 = vpop.xlane.xlu0 %1197
        %v1199 = vsel %vm626, %v1195, 0.0
        %1200 = vadd.xlane.f32.xlu0 %v1199
        %v1201 = vpop.xlane.xlu0 %1200
        %v1202 = vrcp.pop %v1198
        %v1203 = vrcp.pop %v1201
        %v1204 = vmul.f32 %v1193, %v1202
        %v1205 = vmul.f32 %v1195, %v1203
        %v1206 = vpack.c.bf16 %v1204, %v1204
        %v1207 = vpack.c.bf16 %v1205, %v1205
        %1208 = vrot.lane.b32.xlu0 %v624, 112
        %v1209 = vpop.permute.xlu0 %1208
        %v1211 = vsel %vm626, %v1206, 0
        %v1214 = vsel %vm746, %v1209, 0
        %1216 = vmatprep.subr.bf16.mxu0 0
        %1217 = vmatpush1.bf16.msra.mxu0 %v1214
        %1218 = vmatprep.subr.bf16.mxu0 0
        %1219 = vmatpush1.bf16.msra.mxu0 0
        %1220 = vmatprep.subr.bf16.mxu0 0
        %1221 = vmatpush1.bf16.msra.mxu0 0
        %1222 = vmatprep.subr.bf16.mxu0 0
        %1223 = vmatpush1.bf16.msra.mxu0 0
        %1224 = vmatprep.subr.bf16.mxu0 0
        %1225 = vmatpush1.bf16.msra.mxu0 0
        %1226 = vmatprep.subr.bf16.mxu0 0
        %1227 = vmatpush1.bf16.msra.mxu0 0
        %1228 = vmatprep.subr.bf16.mxu0 0
        %1229 = vmatpush1.bf16.msra.mxu0 0
        %1230 = vmatprep.subr.bf16.mxu0 0
        %1231 = vmatpush1.bf16.msra.mxu0 0
        %1232 = vmatprep.subr.bf16.mxu0 0
        %1233 = vmatpush1.bf16.msra.mxu0 0
        %1234 = vmatprep.subr.bf16.mxu0 0
        %1235 = vmatpush1.bf16.msra.mxu0 0
        %1236 = vmatprep.subr.bf16.mxu0 0
        %1237 = vmatpush1.bf16.msra.mxu0 0
        %1238 = vmatprep.subr.bf16.mxu0 0
        %1239 = vmatpush1.bf16.msra.mxu0 0
        %1240 = vmatprep.subr.bf16.mxu0 0
        %1241 = vmatpush1.bf16.msra.mxu0 0
        %1242 = vmatprep.subr.bf16.mxu0 0
        %1243 = vmatpush1.bf16.msra.mxu0 0
        %1244 = vmatprep.subr.bf16.mxu0 0
        %1245 = vmatpush1.bf16.msra.mxu0 0
        %1246 = vmatprep.subr.bf16.mxu0 0
        %1247 = vmatpush1.bf16.msra.mxu0 0
        %1248 = vmatprep.mubr.bf16.mxu0 0
        %1249 = vmatmul.mubr.bf16.gmra.mrb[0].mxu0 %v1211
        %v1250 = vpop.f32.mrb[0].mxu0
        %v1251 = vadd.f32 0.0, %v1250
        %v1252 = vpop.f32.mrb[0].mxu0
        %v1253 = vpop.f32.mrb[0].mxu0
        %v1254 = vpop.f32.mrb[0].mxu0
        %1255 = vdwg.mxu0
        %1256 = vrot.lane.b32.xlu0 %v625, 112
        %v1257 = vpop.permute.xlu0 %1256
        %v1259 = vsel %vm626, %v1207, 0
        %v1262 = vsel %vm746, %v1257, 0
        %1264 = vmatprep.subr.bf16.mxu0 0
        %1265 = vmatpush1.bf16.msra.mxu0 %v1262
        %1266 = vmatprep.subr.bf16.mxu0 0
        %1267 = vmatpush1.bf16.msra.mxu0 0
        %1268 = vmatprep.subr.bf16.mxu0 0
        %1269 = vmatpush1.bf16.msra.mxu0 0
        %1270 = vmatprep.subr.bf16.mxu0 0
        %1271 = vmatpush1.bf16.msra.mxu0 0
        %1272 = vmatprep.subr.bf16.mxu0 0
        %1273 = vmatpush1.bf16.msra.mxu0 0
        %1274 = vmatprep.subr.bf16.mxu0 0
        %1275 = vmatpush1.bf16.msra.mxu0 0
        %1276 = vmatprep.subr.bf16.mxu0 0
        %1277 = vmatpush1.bf16.msra.mxu0 0
        %1278 = vmatprep.subr.bf16.mxu0 0
        %1279 = vmatpush1.bf16.msra.mxu0 0
        %1280 = vmatprep.subr.bf16.mxu0 0
        %1281 = vmatpush1.bf16.msra.mxu0 0
        %1282 = vmatprep.subr.bf16.mxu0 0
        %1283 = vmatpush1.bf16.msra.mxu0 0
        %1284 = vmatprep.subr.bf16.mxu0 0
        %1285 = vmatpush1.bf16.msra.mxu0 0
        %1286 = vmatprep.subr.bf16.mxu0 0
        %1287 = vmatpush1.bf16.msra.mxu0 0
        %1288 = vmatprep.subr.bf16.mxu0 0
        %1289 = vmatpush1.bf16.msra.mxu0 0
        %1290 = vmatprep.subr.bf16.mxu0 0
        %1291 = vmatpush1.bf16.msra.mxu0 0
        %1292 = vmatprep.subr.bf16.mxu0 0
        %1293 = vmatpush1.bf16.msra.mxu0 0
        %1294 = vmatprep.subr.bf16.mxu0 0
        %1295 = vmatpush1.bf16.msra.mxu0 0
        %1296 = vmatprep.mubr.bf16.mxu0 0
        %1297 = vmatmul.mubr.bf16.gmra.mrb[0].mxu0 %v1259
        %v1298 = vpop.f32.mrb[0].mxu0
        %v1299 = vadd.f32 0.0, %v1298
        %v1300 = vpop.f32.mrb[0].mxu0
        %v1301 = vpop.f32.mrb[0].mxu0
        %v1302 = vpop.f32.mrb[0].mxu0
        %1303 = vdwg.mxu0
        %v1304 = vpack.c.bf16 %v1251, %v1251
        %v1305 = vpack.c.bf16 %v1299, %v1299
        %v1308 = vunpack.c.l.b16 %v1304
        %v1309 = vunpack.c.l.b16 %v1305
        %v1310 = vpack.c.b16 %v1308, %v1308
        %v1311 = vpack.c.b16 %v1309, %v1309
        %1312 = vrot.lane.b32.xlu0 %v1310, 16
        %v1313 = vpop.permute.xlu0 %1312
        %1314 = vrot.lane.b32.xlu0 %v1311, 16
        %v1315 = vpop.permute.xlu0 %1314
        %vm1318 = vcmask 191616
        %1319 = vst.msk [vmem:[#allocation2] sm:$0xf] %vm1318, %v1313
        %1320 = vst.msk [vmem:[#allocation2 + $0x4] sm:$0xf] %vm1318, %v1315
        %1321 = vrot.lane.b32.xlu0 %v620, 104
        %v1322 = vpop.permute.xlu0 %1321
        %1323 = vrot.lane.b32.xlu0 %v622, 104
        %v1324 = vpop.permute.xlu0 %1323
        %v1326 = vsel %vm626, %v1322, 0
        %v1329 = vsel %vm626, %v1324, 0
        %1331 = vmatprep.subr.bf16.mxu0 0
        %1332 = vmatpush1.bf16.xpose.msra.mxu0 %v1329
        %1333 = vmatprep.subr.bf16.mxu0 0
        %1334 = vmatpush1.bf16.xpose.msra.mxu0 0
        %1335 = vmatprep.subr.bf16.mxu0 0
        %1336 = vmatpush1.bf16.xpose.msra.mxu0 0
        %1337 = vmatprep.subr.bf16.mxu0 0
        %1338 = vmatpush1.bf16.xpose.msra.mxu0 0
        %1339 = vmatprep.subr.bf16.mxu0 0
        %1340 = vmatpush1.bf16.xpose.msra.mxu0 0
        %1341 = vmatprep.subr.bf16.mxu0 0
        %1342 = vmatpush1.bf16.xpose.msra.mxu0 0
        %1343 = vmatprep.subr.bf16.mxu0 0
        %1344 = vmatpush1.bf16.xpose.msra.mxu0 0
        %1345 = vmatprep.subr.bf16.mxu0 0
        %1346 = vmatpush1.bf16.xpose.msra.mxu0 0
        %1347 = vmatprep.subr.bf16.mxu0 0
        %1348 = vmatpush1.bf16.xpose.msra.mxu0 0
        %1349 = vmatprep.subr.bf16.mxu0 0
        %1350 = vmatpush1.bf16.xpose.msra.mxu0 0
        %1351 = vmatprep.subr.bf16.mxu0 0
        %1352 = vmatpush1.bf16.xpose.msra.mxu0 0
        %1353 = vmatprep.subr.bf16.mxu0 0
        %1354 = vmatpush1.bf16.xpose.msra.mxu0 0
        %1355 = vmatprep.subr.bf16.mxu0 0
        %1356 = vmatpush1.bf16.xpose.msra.mxu0 0
        %1357 = vmatprep.subr.bf16.mxu0 0
        %1358 = vmatpush1.bf16.xpose.msra.mxu0 0
        %1359 = vmatprep.subr.bf16.mxu0 0
        %1360 = vmatpush1.bf16.xpose.msra.mxu0 0
        %1361 = vmatprep.subr.bf16.mxu0 0
        %1362 = vmatpush1.bf16.xpose.msra.mxu0 0
        %1363 = vmatprep.mubr.bf16.mxu0 0
        %1364 = vmatmul.mubr.bf16.gmra.mrb[0].mxu0 %v1326
        %v1365 = vpop.f32.mrb[0].mxu0
        %v1366 = vadd.f32 0.0, %v1365
        %v1367 = vpop.f32.mrb[0].mxu0
        %v1368 = vpop.f32.mrb[0].mxu0
        %v1369 = vpop.f32.mrb[0].mxu0
        %1370 = vdwg.mxu0
        %1371 = vrot.lane.b32.xlu0 %v621, 104
        %v1372 = vpop.permute.xlu0 %1371
        %1373 = vrot.lane.b32.xlu0 %v623, 104
        %v1374 = vpop.permute.xlu0 %1373
        %v1376 = vsel %vm626, %v1372, 0
        %v1379 = vsel %vm626, %v1374, 0
        %1381 = vmatprep.subr.bf16.mxu0 0
        %1382 = vmatpush1.bf16.xpose.msra.mxu0 %v1379
        %1383 = vmatprep.subr.bf16.mxu0 0
        %1384 = vmatpush1.bf16.xpose.msra.mxu0 0
        %1385 = vmatprep.subr.bf16.mxu0 0
        %1386 = vmatpush1.bf16.xpose.msra.mxu0 0
        %1387 = vmatprep.subr.bf16.mxu0 0
        %1388 = vmatpush1.bf16.xpose.msra.mxu0 0
        %1389 = vmatprep.subr.bf16.mxu0 0
        %1390 = vmatpush1.bf16.xpose.msra.mxu0 0
        %1391 = vmatprep.subr.bf16.mxu0 0
        %1392 = vmatpush1.bf16.xpose.msra.mxu0 0
        %1393 = vmatprep.subr.bf16.mxu0 0
        %1394 = vmatpush1.bf16.xpose.msra.mxu0 0
        %1395 = vmatprep.subr.bf16.mxu0 0
        %1396 = vmatpush1.bf16.xpose.msra.mxu0 0
        %1397 = vmatprep.subr.bf16.mxu0 0
        %1398 = vmatpush1.bf16.xpose.msra.mxu0 0
        %1399 = vmatprep.subr.bf16.mxu0 0
        %1400 = vmatpush1.bf16.xpose.msra.mxu0 0
        %1401 = vmatprep.subr.bf16.mxu0 0
        %1402 = vmatpush1.bf16.xpose.msra.mxu0 0
        %1403 = vmatprep.subr.bf16.mxu0 0
        %1404 = vmatpush1.bf16.xpose.msra.mxu0 0
        %1405 = vmatprep.subr.bf16.mxu0 0
        %1406 = vmatpush1.bf16.xpose.msra.mxu0 0
        %1407 = vmatprep.subr.bf16.mxu0 0
        %1408 = vmatpush1.bf16.xpose.msra.mxu0 0
        %1409 = vmatprep.subr.bf16.mxu0 0
        %1410 = vmatpush1.bf16.xpose.msra.mxu0 0
        %1411 = vmatprep.subr.bf16.mxu0 0
        %1412 = vmatpush1.bf16.xpose.msra.mxu0 0
        %1413 = vmatprep.mubr.bf16.mxu0 0
        %1414 = vmatmul.mubr.bf16.gmra.mrb[0].mxu0 %v1376
        %v1415 = vpop.f32.mrb[0].mxu0
        %v1416 = vadd.f32 0.0, %v1415
        %v1417 = vpop.f32.mrb[0].mxu0
        %v1418 = vpop.f32.mrb[0].mxu0
        %v1419 = vpop.f32.mrb[0].mxu0
        %1420 = vdwg.mxu0
        %v1421 = vsel %vm626, %v1366, -inf
        %1422 = vmax.xlane.f32.xlu0 %v1421
        %v1423 = vpop.xlane.xlu0 %1422
        %v1424 = vsel %vm626, %v1416, -inf
        %1425 = vmax.xlane.f32.xlu0 %v1424
        %v1426 = vpop.xlane.xlu0 %1425
        %v1427 = vsub.f32 %v1366, %v1423
        %v1428 = vsub.f32 %v1416, %v1426
        %v1429 = vmul.f32 %v1427, 1.442695
        %v1430 = vpow.pop %v1429
        %v1431 = vmul.f32 %v1428, 1.442695
        %v1432 = vpow.pop %v1431
        %v1433 = vsel %vm626, %v1430, 0.0
        %1434 = vadd.xlane.f32.xlu0 %v1433
        %v1435 = vpop.xlane.xlu0 %1434
        %v1436 = vsel %vm626, %v1432, 0.0
        %1437 = vadd.xlane.f32.xlu0 %v1436
        %v1438 = vpop.xlane.xlu0 %1437
        %v1439 = vrcp.pop %v1435
        %v1440 = vrcp.pop %v1438
        %v1441 = vmul.f32 %v1430, %v1439
        %v1442 = vmul.f32 %v1432, %v1440
        %v1443 = vpack.c.bf16 %v1441, %v1441
        %v1444 = vpack.c.bf16 %v1442, %v1442
        %1445 = vrot.lane.b32.xlu0 %v624, 104
        %v1446 = vpop.permute.xlu0 %1445
        %v1448 = vsel %vm626, %v1443, 0
        %v1451 = vsel %vm746, %v1446, 0
        %1453 = vmatprep.subr.bf16.mxu0 0
        %1454 = vmatpush1.bf16.msra.mxu0 %v1451
        %1455 = vmatprep.subr.bf16.mxu0 0
        %1456 = vmatpush1.bf16.msra.mxu0 0
        %1457 = vmatprep.subr.bf16.mxu0 0
        %1458 = vmatpush1.bf16.msra.mxu0 0
        %1459 = vmatprep.subr.bf16.mxu0 0
        %1460 = vmatpush1.bf16.msra.mxu0 0
        %1461 = vmatprep.subr.bf16.mxu0 0
        %1462 = vmatpush1.bf16.msra.mxu0 0
        %1463 = vmatprep.subr.bf16.mxu0 0
        %1464 = vmatpush1.bf16.msra.mxu0 0
        %1465 = vmatprep.subr.bf16.mxu0 0
        %1466 = vmatpush1.bf16.msra.mxu0 0
        %1467 = vmatprep.subr.bf16.mxu0 0
        %1468 = vmatpush1.bf16.msra.mxu0 0
        %1469 = vmatprep.subr.bf16.mxu0 0
        %1470 = vmatpush1.bf16.msra.mxu0 0
        %1471 = vmatprep.subr.bf16.mxu0 0
        %1472 = vmatpush1.bf16.msra.mxu0 0
        %1473 = vmatprep.subr.bf16.mxu0 0
        %1474 = vmatpush1.bf16.msra.mxu0 0
        %1475 = vmatprep.subr.bf16.mxu0 0
        %1476 = vmatpush1.bf16.msra.mxu0 0
        %1477 = vmatprep.subr.bf16.mxu0 0
        %1478 = vmatpush1.bf16.msra.mxu0 0
        %1479 = vmatprep.subr.bf16.mxu0 0
        %1480 = vmatpush1.bf16.msra.mxu0 0
        %1481 = vmatprep.subr.bf16.mxu0 0
        %1482 = vmatpush1.bf16.msra.mxu0 0
        %1483 = vmatprep.subr.bf16.mxu0 0
        %1484 = vmatpush1.bf16.msra.mxu0 0
        %1485 = vmatprep.mubr.bf16.mxu0 0
        %1486 = vmatmul.mubr.bf16.gmra.mrb[0].mxu0 %v1448
        %v1487 = vpop.f32.mrb[0].mxu0
        %v1488 = vadd.f32 0.0, %v1487
        %v1489 = vpop.f32.mrb[0].mxu0
        %v1490 = vpop.f32.mrb[0].mxu0
        %v1491 = vpop.f32.mrb[0].mxu0
        %1492 = vdwg.mxu0
        %1493 = vrot.lane.b32.xlu0 %v625, 104
        %v1494 = vpop.permute.xlu0 %1493
        %v1496 = vsel %vm626, %v1444, 0
        %v1499 = vsel %vm746, %v1494, 0
        %1501 = vmatprep.subr.bf16.mxu0 0
        %1502 = vmatpush1.bf16.msra.mxu0 %v1499
        %1503 = vmatprep.subr.bf16.mxu0 0
        %1504 = vmatpush1.bf16.msra.mxu0 0
        %1505 = vmatprep.subr.bf16.mxu0 0
        %1506 = vmatpush1.bf16.msra.mxu0 0
        %1507 = vmatprep.subr.bf16.mxu0 0
        %1508 = vmatpush1.bf16.msra.mxu0 0
        %1509 = vmatprep.subr.bf16.mxu0 0
        %1510 = vmatpush1.bf16.msra.mxu0 0
        %1511 = vmatprep.subr.bf16.mxu0 0
        %1512 = vmatpush1.bf16.msra.mxu0 0
        %1513 = vmatprep.subr.bf16.mxu0 0
        %1514 = vmatpush1.bf16.msra.mxu0 0
        %1515 = vmatprep.subr.bf16.mxu0 0
        %1516 = vmatpush1.bf16.msra.mxu0 0
        %1517 = vmatprep.subr.bf16.mxu0 0
        %1518 = vmatpush1.bf16.msra.mxu0 0
        %1519 = vmatprep.subr.bf16.mxu0 0
        %1520 = vmatpush1.bf16.msra.mxu0 0
        %1521 = vmatprep.subr.bf16.mxu0 0
        %1522 = vmatpush1.bf16.msra.mxu0 0
        %1523 = vmatprep.subr.bf16.mxu0 0
        %1524 = vmatpush1.bf16.msra.mxu0 0
        %1525 = vmatprep.subr.bf16.mxu0 0
        %1526 = vmatpush1.bf16.msra.mxu0 0
        %1527 = vmatprep.subr.bf16.mxu0 0
        %1528 = vmatpush1.bf16.msra.mxu0 0
        %1529 = vmatprep.subr.bf16.mxu0 0
        %1530 = vmatpush1.bf16.msra.mxu0 0
        %1531 = vmatprep.subr.bf16.mxu0 0
        %1532 = vmatpush1.bf16.msra.mxu0 0
        %1533 = vmatprep.mubr.bf16.mxu0 0
        %1534 = vmatmul.mubr.bf16.gmra.mrb[0].mxu0 %v1496
        %v1535 = vpop.f32.mrb[0].mxu0
        %v1536 = vadd.f32 0.0, %v1535
        %v1537 = vpop.f32.mrb[0].mxu0
        %v1538 = vpop.f32.mrb[0].mxu0
        %v1539 = vpop.f32.mrb[0].mxu0
        %1540 = vdwg.mxu0
        %v1541 = vpack.c.bf16 %v1488, %v1488
        %v1542 = vpack.c.bf16 %v1536, %v1536
        %v1545 = vunpack.c.l.b16 %v1541
        %v1546 = vunpack.c.l.b16 %v1542
        %v1547 = vpack.c.b16 %v1545, %v1545
        %v1548 = vpack.c.b16 %v1546, %v1546
        %1549 = vrot.lane.b32.xlu0 %v1547, 24
        %v1550 = vpop.permute.xlu0 %1549
        %1551 = vrot.lane.b32.xlu0 %v1548, 24
        %v1552 = vpop.permute.xlu0 %1551
        %vm1555 = vcmask 257216
        %1556 = vst.msk [vmem:[#allocation2] sm:$0xf] %vm1555, %v1550
        %1557 = vst.msk [vmem:[#allocation2 + $0x4] sm:$0xf] %vm1555, %v1552
        %v1558 = vld [vmem:[#allocation2] sm:$0xf]
        %v1559 = vld [vmem:[#allocation2 + $0x4] sm:$0xf]
        %v1560 = vld [vmem:[%s6] sm:$0xf]
        %v1561 = vld [vmem:[%s6 + $0x4] sm:$0xf]
        %v1562 = vld [vmem:[%s6 + $0x8] sm:$0xf]
        %v1563 = vld [vmem:[%s6 + $0xc] sm:$0xf]
        %v1564 = vld [vmem:[%s379] sm:$0xff]
        %v1565 = vld [vmem:[%s379 + $0x8] sm:$0xff]
        %v1568 = vunpack.c.l.b16 %v1558
        %v1569 = vunpack.c.l.b16 %v1559
        %v1570 = vpack.c.b16 %v1569, %v1568
        %v1575 = vunpack.c.l.b16 %v1560
        %v1576 = vunpack.c.l.b16 %v1561
        %v1577 = vunpack.c.l.b16 %v1562
        %v1578 = vunpack.c.l.b16 %v1563
        %v1579 = vpack.c.b16 %v1576, %v1575
        %v1580 = vpack.c.b16 %v1578, %v1577
        %v1584 = vsel %vm429, %v1570, 0
        %1586 = vmatprep.subr.bf16.mxu0 0
        %1587 = vmatpush1.bf16.msra.mxu0 %v1579
        %1588 = vmatprep.subr.bf16.mxu0 0
        %1589 = vmatpush1.bf16.msra.mxu0 %v1580
        %1590 = vmatprep.subr.bf16.mxu0 0
        %1591 = vmatpush1.bf16.msra.mxu0 0
        %1592 = vmatprep.subr.bf16.mxu0 0
        %1593 = vmatpush1.bf16.msra.mxu0 0
        %1594 = vmatprep.subr.bf16.mxu0 0
        %1595 = vmatpush1.bf16.msra.mxu0 0
        %1596 = vmatprep.subr.bf16.mxu0 0
        %1597 = vmatpush1.bf16.msra.mxu0 0
        %1598 = vmatprep.subr.bf16.mxu0 0
        %1599 = vmatpush1.bf16.msra.mxu0 0
        %1600 = vmatprep.subr.bf16.mxu0 0
        %1601 = vmatpush1.bf16.msra.mxu0 0
        %1602 = vmatprep.subr.bf16.mxu0 0
        %1603 = vmatpush1.bf16.msra.mxu0 0
        %1604 = vmatprep.subr.bf16.mxu0 0
        %1605 = vmatpush1.bf16.msra.mxu0 0
        %1606 = vmatprep.subr.bf16.mxu0 0
        %1607 = vmatpush1.bf16.msra.mxu0 0
        %1608 = vmatprep.subr.bf16.mxu0 0
        %1609 = vmatpush1.bf16.msra.mxu0 0
        %1610 = vmatprep.subr.bf16.mxu0 0
        %1611 = vmatpush1.bf16.msra.mxu0 0
        %1612 = vmatprep.subr.bf16.mxu0 0
        %1613 = vmatpush1.bf16.msra.mxu0 0
        %1614 = vmatprep.subr.bf16.mxu0 0
        %1615 = vmatpush1.bf16.msra.mxu0 0
        %1616 = vmatprep.subr.bf16.mxu0 0
        %1617 = vmatpush1.bf16.msra.mxu0 0
        %1618 = vmatprep.mubr.bf16.mxu0 0
        %1619 = vmatmul.mubr.bf16.gmra.mrb[0].mxu0 %v1584
        %v1620 = vpop.f32.mrb[0].mxu0
        %v1621 = vadd.f32 %v1564, %v1620
        %v1622 = vpop.f32.mrb[0].mxu0
        %v1623 = vpop.f32.mrb[0].mxu0
        %v1624 = vadd.f32 %v1565, %v1623
        %v1625 = vpop.f32.mrb[0].mxu0
        %1626 = vdwg.mxu0
        %v1627 = vsel %vm429, %v1621, 0.0
        %1628 = vadd.xlane.f32.xlu0 %v1627
        %v1629 = vpop.xlane.xlu0 %1628
        %v1630 = vsel %vm429, %v1624, 0.0
        %1631 = vadd.xlane.f32.xlu0 %v1630
        %v1632 = vpop.xlane.xlu0 %1631
        %v1633 = vrcp.pop 32.0
        %v1634 = vmul.f32 %v1629, %v1633
        %v1635 = vmul.f32 %v1632, %v1633
        %v1636 = vsub.f32 %v1621, %v1634
        %v1637 = vsub.f32 %v1624, %v1635
        %v1638 = vmul.f32 %v1636, %v1636
        %v1639 = vmul.f32 %v1637, %v1637
        %v1640 = vsel %vm429, %v1638, 0.0
        %1641 = vadd.xlane.f32.xlu0 %v1640
        %v1642 = vpop.xlane.xlu0 %1641
        %v1643 = vsel %vm429, %v1639, 0.0
        %1644 = vadd.xlane.f32.xlu0 %v1643
        %v1645 = vpop.xlane.xlu0 %1644
        %v1646 = vmul.f32 %v1642, %v1633
        %v1647 = vmul.f32 %v1645, %v1633
        %v1648 = vadd.f32 %v1646, 1e-05
        %v1649 = vadd.f32 %v1647, 1e-05
        %v1650 = vrsqrt.pop %v1648
        %v1651 = vrsqrt.pop %v1649
        %v1652 = vmul.f32 %v1636, %v1650
        %v1653 = vmul.f32 %v1637, %v1651
        %v1654 = vld [vmem:[%s7] sm:$0x1]
        %v1656 = vlaneseq
        %v1657 = vshrl.u32 %v1656, 7
        %v1658 = vsub.s32 0, %v1657
        %v1659 = vrot.slane %v1654, %v1658
        %v1661 = vmul.f32 %v1652, %v1659
        %v1662 = vmul.f32 %v1653, %v1659
        %v1663 = vld [vmem:[%s8] sm:$0x1]
        %v1665 = vlaneseq
        %v1666 = vshrl.u32 %v1665, 7
        %v1667 = vsub.s32 0, %v1666
        %v1668 = vrot.slane %v1663, %v1667
        %v1670 = vadd.f32 %v1661, %v1668
        %v1671 = vadd.f32 %v1662, %v1668
        %1672 = vst.msk [vmem:[%s374] sm:$0xff] %vm429, %v1670
        %1673 = vst.msk [vmem:[%s374 + $0x8] sm:$0xff] %vm429, %v1671
        %s1674 = sand.u32 %s240, 1
        %s1675 = scalar_lea.sflag [#allocation4], %s1674
        %s1676 = sand.u32 %s240, 1
        %s1677 = smul.addr %s1676, 16
        %s1678 = scalar_lea.vmem [#allocation3], %s1677
        // Predicated region
        $region57: #{mhsa_ln_res.1} parent=55 // pred_check
          %p1679 = pneg %p250
        $region58: #{mhsa_ln_res.1} parent=55 // pred_check_branch
          %1681 = sbr.rel (%p1679) target = $region60
        $region59: #{mhsa_ln_res.1} parent=55 // pred_region
          %s1682 = smul.u32 2, %s23
          %s1684 = ssub.s32 256, 256
          %1685 = vsyncadd %s1675, %s1684
          %s1686 = smul.addr %s1682, 128
          %s1687 = scalar_lea.hbm %s9, %s1686
          %s1688 = sshll.u32 %s1678, 4
          %s1689 = int_to_ptr.vmem [resolvable:$true] %s1688
          %1694 = dma.vmem_to_hbm [thread:$0]  %s1689, 256, %s1687, %s1675, 128, 128, 8
        $region60: #{mhsa_ln_res.1} parent=55 // pred_fallthru
          _
      $region56: #{mhsa_ln_res.1} parent=5 // pred_fallthru
        _
      %p1695 = scmp.le.s32.totalorder 2, %s18
      // Predicated region
      $region61: #{mhsa_ln_res.1} parent=5 // pred_check
        %p1696 = pneg %p1695
      $region62: #{mhsa_ln_res.1} parent=5 // pred_check_branch
        %1698 = sbr.rel (%p1696) target = $region64
      $region63: #{mhsa_ln_res.1} parent=5 // pred_region
        %s1699 = ssub.s32 %s18, 2
        // Predicated region
        $region65: #{mhsa_ln_res.1} parent=63 // pred_check
          %p1700 = pneg %p256
        $region66: #{mhsa_ln_res.1} parent=63 // pred_check_branch
          %1702 = sbr.rel (%p1700) target = $region68
        $region67: #{mhsa_ln_res.1} parent=63 // pred_region
          %s1703 = sand.u32 %s241, 1
          %s1704 = scalar_lea.sflag [#allocation4], %s1703
          %s1705 = sand.u32 %s241, 1
          %s1706 = smul.addr %s1705, 16
          %s1707 = scalar_lea.vmem [#allocation3], %s1706
          %1708 = dma.done %s1704, 256
        $region68: #{mhsa_ln_res.1} parent=63 // pred_fallthru
          _
      $region64: #{mhsa_ln_res.1} parent=5 // pred_fallthru
        _
    $region6: #{mhsa_ln_res.1} parent=1 // loop_footer
      %s22 = sadd.s32 1, %s18
    $region7: #{mhsa_ln_res.1} parent=1 // loop_footer_branch
      %17 = sbr.rel target = $region3
    $region8: #{mhsa_ln_res.1} parent=1 // loop_exit
      _
    %1709 = vsyncpa [#allocation4], 1
    %s1710 = scalar_lea.sflag [#allocation4], 1
    %1711 = vsyncpa %s1710, 1

</llo_original>
